<compile_context>
chip_gen: v7x
topology: tpu7x:2x2x1
jax: 0.10.0
libtpu: 0.0.40
codegen_flags: <defaults>
</compile_context>

<pallas_src>
import functools
import math

import jax
import jax.numpy as jnp
from jax.experimental import pallas as pl
from jax.experimental.pallas import tpu as pltpu

LN_EPS = 1e-6
L2_EPS = 1e-12
NEG_INF = -1e30


# ----------------------------------------------------------------------------
# small host-side helpers
# ----------------------------------------------------------------------------
def _round_up(n, m):
    return ((n + m - 1) // m) * m


def _nbytes(shape, dtype):
    return math.prod(shape) * jnp.dtype(dtype).itemsize


def _vmem_cap_bytes():
    # generation-aware VMEM capacity (128 MiB v5e/v6e, 64 MiB v7x); safe fallback.
    try:
        cap = getattr(pltpu.get_tpu_info(), "vmem_capacity_bytes", None)
        if cap:
            return int(cap)
    except Exception:
        pass
    return 64 << 20


def _vmem_limit(block_bytes, scratch_bytes=0):
    cap = _vmem_cap_bytes()
    need = 2 * block_bytes + scratch_bytes + (8 << 20)   # 2x = double-buffered blocks + headroom
    return int(max(32 << 20, min(cap - (8 << 20), need)))


def _pick_batch_block(B, max_bc=8):
    # Largest block <= max_bc that divides B; prefer keeping >=2 blocks so v7x's two
    # TensorCores both get work on the "parallel" batch axis when B allows it.
    divs = [d for d in range(1, min(B, max_bc) + 1) if B % d == 0]
    two_block = [d for d in divs if d >= 2 and B // d >= 2]
    return max(two_block) if two_block else max(divs)


# ----------------------------------------------------------------------------
# in-kernel helpers (traced inside the Pallas kernel)
# ----------------------------------------------------------------------------
def _layer_norm(v, g, b):
    mu = jnp.mean(v, axis=-1, keepdims=True)
    var = jnp.mean(jnp.square(v - mu), axis=-1, keepdims=True)
    return (v - mu) * jax.lax.rsqrt(var + LN_EPS) * g + b


def _gelu_tanh(x):
    # tanh-approx GELU: single EUP tanh instead of an erf polynomial on the largest
    # elementwise tensor; deviation from nn.GELU (exact erf) is ~1e-3, below bf16 noise.
    c = 0.7978845608028654  # sqrt(2/pi)
    return 0.5 * x * (1.0 + jnp.tanh(c * (x + 0.044715 * x * x * x)))


# ----------------------------------------------------------------------------
# one fused kernel: patch embed (l==0) + full transformer stack + final L2 normalize
# grid = (B // Bc, L); activations resident in VMEM scratch across layers
# ----------------------------------------------------------------------------
def _eva_kernel(patches_ref, pw_ref, clspos_ref,
                ln1g_ref, ln1b_ref, wqkv_ref, bqkv_ref, wproj_ref, bproj_ref,
                ln2g_ref, ln2b_ref, w1_ref, b1_ref, w2_ref, b2_ref,
                o_ref, x_vmem, qkv_vmem, attn_vmem,
                *, num_heads, head_dim, n_valid, bc):
    l = pl.program_id(1)
    n_layers = pl.num_programs(1)
    BN, D = x_vmem.shape
    Npad = BN // bc
    Kpad = patches_ref.shape[-1]
    scale = 1.0 / math.sqrt(head_dim)

    # ---- l == 0: fused patch embedding + cls token + pos embed (single aligned store) ----
    @pl.when(l == 0)
    def _():
        pv = patches_ref[...].reshape(BN, Kpad)                      # bf16, row0/pad rows are zero
        emb = jnp.dot(pv, pw_ref[...], preferred_element_type=jnp.float32)
        # clspos already holds [pos0+cls | pos_i+conv_bias | zeros] per row
        x_vmem[...] = (emb.reshape(bc, Npad, D) + clspos_ref[...][None]).reshape(BN, D)

    # ---- multi-head self-attention: fused QKV matmul, per-image/per-head-pair softmax ----
    h = _layer_norm(x_vmem[...], ln1g_ref[0], ln1b_ref[0]).astype(jnp.bfloat16)
    qkv_vmem[...] = (jnp.dot(h, wqkv_ref[0], preferred_element_type=jnp.float32)
                     + bqkv_ref[0]).astype(jnp.bfloat16)             # one bulk f32->bf16 cast

    if n_valid < Npad:                                               # static: mask padded keys
        key_ids = jax.lax.broadcasted_iota(jnp.int32, (1, Npad), 1)
        key_bias = jnp.where(key_ids < n_valid, 0.0, NEG_INF).astype(jnp.float32)
    else:
        key_bias = None

    hpg = 2 if num_heads % 2 == 0 else 1       # heads per group -> lane-dense attn stores
    ngrp = num_heads // hpg
    gd = hpg * head_dim

    def image_body(b, carry):
        r0 = pl.multiple_of(b * Npad, 16)                            # Npad is a multiple of 16
        for g in range(ngrp):
            outs = []
            for j in range(hpg):
                c = (g * hpg + j) * head_dim
                q = qkv_vmem[pl.ds(r0, Npad), c:c + head_dim]
                k = qkv_vmem[pl.ds(r0, Npad), D + c:D + c + head_dim]
                v = qkv_vmem[pl.ds(r0, Npad), 2 * D + c:2 * D + c + head_dim]
                s = jax.lax.dot_general(q, k, (((1,), (1,)), ((), ())),
                                        preferred_element_type=jnp.float32) * scale
                if key_bias is not None:
                    s = s + key_bias
                s = s - jnp.max(s, axis=-1, keepdims=True)
                e = jnp.exp(s)
                pmat = (e * pl.reciprocal(jnp.sum(e, axis=-1, keepdims=True),
                                          approx=True)).astype(jnp.bfloat16)
                outs.append(jnp.dot(pmat, v, preferred_element_type=jnp.float32))
            og = outs[0] if hpg == 1 else jnp.concatenate(outs, axis=-1)
            attn_vmem[pl.ds(r0, Npad), g * gd:(g + 1) * gd] = og.astype(jnp.bfloat16)
        return carry

    if bc == 1:
        image_body(0, 0)
    else:
        jax.lax.fori_loop(0, bc, image_body, 0)

    # fused output projection + residual
    x_vmem[...] = (x_vmem[...]
                   + jnp.dot(attn_vmem[...], wproj_ref[0], preferred_element_type=jnp.float32)
                   + bproj_ref[0])

    # ---- MLP ----
    h2 = _layer_norm(x_vmem[...], ln2g_ref[0], ln2b_ref[0]).astype(jnp.bfloat16)
    m = _gelu_tanh(jnp.dot(h2, w1_ref[0], preferred_element_type=jnp.float32) + b1_ref[0])
    x_vmem[...] = (x_vmem[...]
                   + jnp.dot(m.astype(jnp.bfloat16), w2_ref[0],
                             preferred_element_type=jnp.float32)
                   + b2_ref[0])

    # ---- final F.normalize(dim=-1), fused into the last layer's write-out ----
    @pl.when(l == n_layers - 1)
    def _():
        xf = x_vmem[...]
        inv = jax.lax.rsqrt(jnp.maximum(jnp.sum(xf * xf, axis=-1, keepdims=True),
                                        L2_EPS * L2_EPS))
        o_ref[...] = (xf * inv).reshape(bc, Npad, D)


def transformer_stack(patches, params, num_heads, head_dim, n_valid, bc):
    B, Npad, Kpad = patches.shape
    D = params["clspos"].shape[1]
    L = params["wqkv"].shape[0]
    BN = bc * Npad
    f32 = jnp.float32

    weight_args = [params[k] for k in ("ln1_g", "ln1_b", "wqkv", "bqkv", "wproj", "bproj",
                                       "ln2_g", "ln2_b", "w1", "b1", "w2", "b2")]

    def wspec(arr):
        nd = arr.ndim
        return pl.BlockSpec((1,) + arr.shape[1:], lambda b, l, _nd=nd: (l,) + (0,) * (_nd - 1))

    in_specs = ([pl.BlockSpec((bc, Npad, Kpad), lambda b, l: (b, 0, 0)),     # resident across l
                 pl.BlockSpec(params["patch_w"].shape, lambda b, l: (0, 0)),
                 pl.BlockSpec(params["clspos"].shape, lambda b, l: (0, 0))]
                + [wspec(a) for a in weight_args])

    blk = (_nbytes((bc, Npad, Kpad), patches.dtype)
           + _nbytes(params["patch_w"].shape, params["patch_w"].dtype)
           + _nbytes(params["clspos"].shape, params["clspos"].dtype)
           + sum(_nbytes((1,) + a.shape[1:], a.dtype) for a in weight_args)
           + _nbytes((bc, Npad, D), f32))
    scratch = (_nbytes((BN, D), f32) + _nbytes((BN, 3 * D), jnp.bfloat16)
               + _nbytes((BN, D), jnp.bfloat16))

    kern = functools.partial(_eva_kernel, num_heads=num_heads, head_dim=head_dim,
                             n_valid=n_valid, bc=bc)
    return pl.pallas_call(
        kern,
        out_shape=jax.ShapeDtypeStruct((B, Npad, D), f32),
        grid=(B // bc, L),
        in_specs=in_specs,
        out_specs=pl.BlockSpec((bc, Npad, D), lambda b, l: (b, 0, 0)),
        scratch_shapes=[pltpu.VMEM((BN, D), f32),            # activations, resident across layers
                        pltpu.VMEM((BN, 3 * D), jnp.bfloat16),   # post-bias qkv (bf16)
                        pltpu.VMEM((BN, D), jnp.bfloat16)],      # per-head-pair attn output (bf16)
        compiler_params=pltpu.CompilerParams(
            dimension_semantics=("parallel", "arbitrary"),
            vmem_limit_bytes=_vmem_limit(blk, scratch)),
    )(patches, params["patch_w"], params["clspos"], *weight_args)


# ----------------------------------------------------------------------------
# Glue: patch unfold (+padding), parameter init, full forward
# ----------------------------------------------------------------------------
def extract_patches(image, p, k_pad, n_pad):
    # NCHW -> (B, Npad, Kpad) bf16, patch-vector order (c, kh, kw) matching conv weight flatten.
    # Row 0 is a zero "cls" patch and trailing rows are zero padding, so the in-kernel matmul
    # output is already (Npad, D) and a single aligned store suffices.
    B, C, H, W = image.shape
    gh, gw = H // p, W // p
    x = image.reshape(B, C, gh, p, gw, p).transpose(0, 2, 4, 1, 3, 5)
    x = x.reshape(B, gh * gw, C * p * p)
    K = C * p * p
    P = gh * gw
    out = jnp.zeros((B, n_pad, k_pad), jnp.float32)
    out = out.at[:, 1:1 + P, :K].set(x)
    return out.astype(jnp.bfloat16)


def init_params(key, cfg, in_chans=3, seq_align=16):
    D = cfg["width"]
    p = cfg["patch_size"]
    M = int(D * cfg["mlp_ratio"])
    L = cfg["layers"]
    P = (cfg["image_size"] // p) ** 2
    N = P + 1
    n_pad = _round_up(N, seq_align)   # bf16 sublane tile; padded keys masked in the softmax
    K = in_chans * p * p
    k_pad = _round_up(K, 128)         # lane-dense contraction for the patch matmul

    keys = jax.random.split(key, 8)
    nrm = lambda k, shp: 0.02 * jax.random.normal(k, shp, jnp.float32)

    # Conv2d weight (D, C, p, p) flattened & transposed -> (K, D), zero-padded to (Kpad, D).
    w_conv = nrm(keys[0], (D, in_chans, p, p)).reshape(D, K).T
    patch_w = jnp.zeros((k_pad, D), jnp.float32).at[:K, :].set(w_conv).astype(jnp.bfloat16)
    conv_b = nrm(keys[1], (D,))

    cls_token = nrm(keys[2], (1, D))
    pos = nrm(keys[3], (N, D))
    # clspos table: row 0 = pos[0]+cls (no conv bias), rows 1..N-1 = pos[i]+conv_bias, pad rows 0
    clspos = jnp.zeros((n_pad, D), jnp.float32)
    clspos = clspos.at[0, :].set(pos[0] + cls_token[0])
    clspos = clspos.at[1:N, :].set(pos[1:] + conv_b[None, :])

    kq, kp, k1, k2 = (jax.random.split(keys[4 + i], L) for i in range(4))
    wqkv = jnp.stack([nrm(kq[i], (3 * D, D)).T for i in range(L)])    # (L, D, 3D)
    wproj = jnp.stack([nrm(kp[i], (D, D)).T for i in range(L)])       # (L, D, D)
    w1 = jnp.stack([nrm(k1[i], (M, D)).T for i in range(L)])          # (L, D, M)
    w2 = jnp.stack([nrm(k2[i], (D, M)).T for i in range(L)])          # (L, M, D)

    return {
        "patch_w": patch_w, "clspos": clspos,
        "ln1_g": jnp.ones((L, 1, D), jnp.float32), "ln1_b": jnp.zeros((L, 1, D), jnp.float32),
        "wqkv": wqkv.astype(jnp.bfloat16),
        # fused qkv bias layout = [q_bias | zeros (k has no bias in EVA) | v_bias]
        "bqkv": jnp.zeros((L, 1, 3 * D), jnp.float32),
        "wproj": wproj.astype(jnp.bfloat16), "bproj": jnp.zeros((L, 1, D), jnp.float32),
        "ln2_g": jnp.ones((L, 1, D), jnp.float32), "ln2_b": jnp.zeros((L, 1, D), jnp.float32),
        "w1": w1.astype(jnp.bfloat16), "b1": jnp.zeros((L, 1, M), jnp.float32),
        "w2": w2.astype(jnp.bfloat16), "b2": jnp.zeros((L, 1, D), jnp.float32),
    }


def eva_clip_forward(image, params, cfg, batch_block=None):
    """EvaClipEncoderWrapper.forward: visual(..., return_all_features=True) then F.normalize(dim=-1)."""
    p = cfg["patch_size"]
    D = cfg["width"]
    head_dim = cfg["head_width"]
    num_heads = D // head_dim
    n_tokens = (cfg["image_size"] // p) ** 2 + 1

    n_pad = params["clspos"].shape[0]
    k_pad = params["patch_w"].shape[0]
    B = image.shape[0]
    bc = _pick_batch_block(B) if batch_block is None else batch_block

    patches = extract_patches(image.astype(jnp.float32), p, k_pad, n_pad)     # host-side unfold
    # pos_drop / patch_dropout / drop_path are identity in eval mode (rate 0 / None)
    out = transformer_stack(patches, params, num_heads, head_dim, n_tokens, bc)
    return out[:, :n_tokens, :]                                               # drop seq padding


if __name__ == "__main__":
    # Small EVA vision config: img 16, patch 8 -> 4 patches + cls = 5 tokens (padded to 16),
    # width 32, 4 heads (head_width 8), 2 layers, mlp_ratio 4 -> hidden 128.
    cfg = dict(image_size=16, patch_size=8, width=32, layers=2, head_width=8, mlp_ratio=4.0)

    key = jax.random.PRNGKey(0)
    k_img, k_par = jax.random.split(key)
    image = jax.random.normal(k_img, (2, 3, 16, 16), jnp.float32)   # NCHW like PyTorch

    params = init_params(k_par, cfg)
    out = jax.block_until_ready(eva_clip_forward(image, params, cfg))

    n_tokens = (cfg["image_size"] // cfg["patch_size"]) ** 2 + 1
    assert out.shape == (2, n_tokens, cfg["width"]), out.shape
    # every token is unit-norm after F.normalize
    norms = jnp.linalg.norm(out, axis=-1)
    assert bool(jnp.all(jnp.abs(norms - 1.0) < 1e-3)), norms
    print("KERNEL_OK")
</pallas_src>

<mosaic_0001>
module attributes {stable_mosaic.version = 11 : i64} {
  func.func @_eva_kernel(%arg0: i32, %arg1: i32, %arg2: memref<2x16x256xbf16, #tpu.memory_space<vmem>>, %arg3: memref<256x32xbf16, #tpu.memory_space<vmem>>, %arg4: memref<16x32xf32, #tpu.memory_space<vmem>>, %arg5: memref<1x1x32xf32, #tpu.memory_space<vmem>>, %arg6: memref<1x1x32xf32, #tpu.memory_space<vmem>>, %arg7: memref<1x32x96xbf16, #tpu.memory_space<vmem>>, %arg8: memref<1x1x96xf32, #tpu.memory_space<vmem>>, %arg9: memref<1x32x32xbf16, #tpu.memory_space<vmem>>, %arg10: memref<1x1x32xf32, #tpu.memory_space<vmem>>, %arg11: memref<1x1x32xf32, #tpu.memory_space<vmem>>, %arg12: memref<1x1x32xf32, #tpu.memory_space<vmem>>, %arg13: memref<1x32x128xbf16, #tpu.memory_space<vmem>>, %arg14: memref<1x1x128xf32, #tpu.memory_space<vmem>>, %arg15: memref<1x128x32xbf16, #tpu.memory_space<vmem>>, %arg16: memref<1x1x32xf32, #tpu.memory_space<vmem>>, %arg17: memref<2x16x32xf32, #tpu.memory_space<vmem>>, %arg18: memref<32x32xf32, #tpu.memory_space<vmem>>, %arg19: memref<32x96xbf16, #tpu.memory_space<vmem>>, %arg20: memref<32x32xbf16, #tpu.memory_space<vmem>>) attributes {dimension_semantics = [#tpu.dimension_semantics<parallel>, #tpu.dimension_semantics<arbitrary>], iteration_bounds = array<i64: 1, 2>, scalar_prefetch = 0 : i64, scratch_operands = 3 : i64, tpu.core_type = #tpu.core_type<tc>, window_params = [{transform_indices = @transform_0, window_bounds = array<i64: 2, 16, 256>}, {pipeline_mode = #tpu.pipeline_mode<synchronous>, transform_indices = @transform_1, window_bounds = array<i64: 256, 32>}, {pipeline_mode = #tpu.pipeline_mode<synchronous>, transform_indices = @transform_2, window_bounds = array<i64: 16, 32>}, {transform_indices = @transform_3, window_bounds = array<i64: 1, 1, 32>}, {transform_indices = @transform_4, window_bounds = array<i64: 1, 1, 32>}, {transform_indices = @transform_5, window_bounds = array<i64: 1, 32, 96>}, {transform_indices = @transform_6, window_bounds = array<i64: 1, 1, 96>}, {transform_indices = @transform_7, window_bounds = array<i64: 1, 32, 32>}, {transform_indices = @transform_8, window_bounds = array<i64: 1, 1, 32>}, {transform_indices = @transform_9, window_bounds = array<i64: 1, 1, 32>}, {transform_indices = @transform_10, window_bounds = array<i64: 1, 1, 32>}, {transform_indices = @transform_11, window_bounds = array<i64: 1, 32, 128>}, {transform_indices = @transform_12, window_bounds = array<i64: 1, 1, 128>}, {transform_indices = @transform_13, window_bounds = array<i64: 1, 128, 32>}, {transform_indices = @transform_14, window_bounds = array<i64: 1, 1, 32>}, {transform_indices = @transform_15, window_bounds = array<i64: 2, 16, 32>}]} {
    %c0_i32 = arith.constant 0 : i32
    %0 = arith.cmpi eq, %arg1, %c0_i32 : i32
    %1 = arith.extui %0 : i1 to i32
    %c0_i32_0 = arith.constant 0 : i32
    %2 = arith.cmpi ne, %1, %c0_i32_0 : i32
    scf.if %2 {
      %c0_75 = arith.constant 0 : index
      %c0_76 = arith.constant 0 : index
      %c0_77 = arith.constant 0 : index
      %120 = vector.load %arg2[%c0_75, %c0_76, %c0_77] : memref<2x16x256xbf16, #tpu.memory_space<vmem>>, vector<2x16x256xbf16>
      %121 = vector.shape_cast %120 : vector<2x16x256xbf16> to vector<32x256xbf16>
      %c0_78 = arith.constant 0 : index
      %c0_79 = arith.constant 0 : index
      %122 = vector.load %arg3[%c0_78, %c0_79] : memref<256x32xbf16, #tpu.memory_space<vmem>>, vector<256x32xbf16>
      %cst_80 = arith.constant dense<0.000000e+00> : vector<32x32xf32>
      %123 = tpu.matmul %121, %122, %cst_80 {dimension_numbers = #tpu.dot_dimension_numbers<[1], [0], [0], [1], [0, 0, 1, 1], [], []>} : vector<32x256xbf16>, vector<256x32xbf16>, vector<32x32xf32> -> vector<32x32xf32>
      %124 = vector.shape_cast %123 : vector<32x32xf32> to vector<2x16x32xf32>
      %c0_81 = arith.constant 0 : index
      %c0_82 = arith.constant 0 : index
      %125 = vector.load %arg4[%c0_81, %c0_82] : memref<16x32xf32, #tpu.memory_space<vmem>>, vector<16x32xf32>
      %126 = vector.shape_cast %125 : vector<16x32xf32> to vector<1x16x32xf32>
      %127 = vector.broadcast %126 : vector<1x16x32xf32> to vector<2x16x32xf32>
      %128 = arith.addf %124, %127 : vector<2x16x32xf32>
      %129 = vector.shape_cast %128 : vector<2x16x32xf32> to vector<32x32xf32>
      %c0_83 = arith.constant 0 : index
      %c0_84 = arith.constant 0 : index
      %130 = vector.load %arg18[%c0_83, %c0_84] : memref<32x32xf32, #tpu.memory_space<vmem>>, vector<32x32xf32>
      tpu.vector_store %arg18[%c0_83, %c0_84], %129 {strides = array<i32>} : memref<32x32xf32, #tpu.memory_space<vmem>>, vector<32x32xf32>,
    } else {
    }
    %c0 = arith.constant 0 : index
    %c0_1 = arith.constant 0 : index
    %3 = vector.load %arg18[%c0, %c0_1] : memref<32x32xf32, #tpu.memory_space<vmem>>, vector<32x32xf32>
    %c0_2 = arith.constant 0 : index
    %c0_3 = arith.constant 0 : index
    %c0_4 = arith.constant 0 : index
    %4 = vector.load %arg5[%c0_2, %c0_3, %c0_4] : memref<1x1x32xf32, #tpu.memory_space<vmem>>, vector<1x1x32xf32>
    %5 = vector.shape_cast %4 : vector<1x1x32xf32> to vector<1x32xf32>
    %c0_5 = arith.constant 0 : index
    %c0_6 = arith.constant 0 : index
    %c0_7 = arith.constant 0 : index
    %6 = vector.load %arg6[%c0_5, %c0_6, %c0_7] : memref<1x1x32xf32, #tpu.memory_space<vmem>>, vector<1x1x32xf32>
    %7 = vector.shape_cast %6 : vector<1x1x32xf32> to vector<1x32xf32>
    %cst = arith.constant dense<0.000000e+00> : vector<32xf32>
    %8 = vector.multi_reduction <add>, %3, %cst [1] : vector<32x32xf32> to vector<32xf32>
    %9 = vector.shape_cast %8 : vector<32xf32> to vector<32x1xf32>
    %cst_8 = arith.constant 3.200000e+01 : f32
    %10 = vector.broadcast %cst_8 : f32 to vector<32x1xf32>
    %11 = arith.divf %9, %10 : vector<32x1xf32>
    %12 = vector.broadcast %11 : vector<32x1xf32> to vector<32x32xf32>
    %13 = arith.subf %3, %12 : vector<32x32xf32>
    %14 = arith.mulf %13, %13 : vector<32x32xf32>
    %cst_9 = arith.constant dense<0.000000e+00> : vector<32xf32>
    %15 = vector.multi_reduction <add>, %14, %cst_9 [1] : vector<32x32xf32> to vector<32xf32>
    %16 = vector.shape_cast %15 : vector<32xf32> to vector<32x1xf32>
    %cst_10 = arith.constant 3.200000e+01 : f32
    %17 = vector.broadcast %cst_10 : f32 to vector<32x1xf32>
    %18 = arith.divf %16, %17 : vector<32x1xf32>
    %19 = vector.broadcast %11 : vector<32x1xf32> to vector<32x32xf32>
    %20 = arith.subf %3, %19 : vector<32x32xf32>
    %cst_11 = arith.constant 9.99999997E-7 : f32
    %21 = vector.broadcast %cst_11 : f32 to vector<32x1xf32>
    %22 = arith.addf %18, %21 : vector<32x1xf32>
    %23 = math.rsqrt %22 : vector<32x1xf32>
    %24 = vector.broadcast %23 : vector<32x1xf32> to vector<32x32xf32>
    %25 = arith.mulf %20, %24 : vector<32x32xf32>
    %26 = vector.broadcast %5 : vector<1x32xf32> to vector<32x32xf32>
    %27 = arith.mulf %25, %26 : vector<32x32xf32>
    %28 = vector.broadcast %7 : vector<1x32xf32> to vector<32x32xf32>
    %29 = arith.addf %27, %28 : vector<32x32xf32>
    %30 = arith.truncf %29 : vector<32x32xf32> to vector<32x32xbf16>
    %c0_12 = arith.constant 0 : index
    %c0_13 = arith.constant 0 : index
    %c0_14 = arith.constant 0 : index
    %31 = vector.load %arg7[%c0_12, %c0_13, %c0_14] : memref<1x32x96xbf16, #tpu.memory_space<vmem>>, vector<1x32x96xbf16>
    %32 = vector.shape_cast %31 : vector<1x32x96xbf16> to vector<32x96xbf16>
    %cst_15 = arith.constant dense<0.000000e+00> : vector<32x96xf32>
    %33 = tpu.matmul %30, %32, %cst_15 {dimension_numbers = #tpu.dot_dimension_numbers<[1], [0], [0], [1], [0, 0, 1, 1], [], []>} : vector<32x32xbf16>, vector<32x96xbf16>, vector<32x96xf32> -> vector<32x96xf32>
    %c0_16 = arith.constant 0 : index
    %c0_17 = arith.constant 0 : index
    %c0_18 = arith.constant 0 : index
    %34 = vector.load %arg8[%c0_16, %c0_17, %c0_18] : memref<1x1x96xf32, #tpu.memory_space<vmem>>, vector<1x1x96xf32>
    %35 = vector.shape_cast %34 : vector<1x1x96xf32> to vector<1x96xf32>
    %36 = vector.broadcast %35 : vector<1x96xf32> to vector<32x96xf32>
    %37 = arith.addf %33, %36 : vector<32x96xf32>
    %38 = arith.truncf %37 : vector<32x96xf32> to vector<32x96xbf16>
    %c0_19 = arith.constant 0 : index
    %c0_20 = arith.constant 0 : index
    %39 = vector.load %arg19[%c0_19, %c0_20] : memref<32x96xbf16, #tpu.memory_space<vmem>>, vector<32x96xbf16>
    tpu.vector_store %arg19[%c0_19, %c0_20], %38 {strides = array<i32>} : memref<32x96xbf16, #tpu.memory_space<vmem>>, vector<32x96xbf16>,
    %40 = tpu.iota {dimensions = array<i32: 1>} : vector<1x16xi32>
    %c5_i32 = arith.constant 5 : i32
    %41 = vector.broadcast %c5_i32 : i32 to vector<1x16xi32>
    %42 = arith.cmpi slt, %40, %41 : vector<1x16xi32>
    %cst_21 = arith.constant 0.000000e+00 : f32
    %cst_22 = arith.constant -1.000000e+30 : f32
    %43 = vector.broadcast %cst_21 : f32 to vector<1x16xf32>
    %44 = vector.broadcast %cst_22 : f32 to vector<1x16xf32>
    %45 = arith.select %42, %43, %44 : vector<1x16xi1>, vector<1x16xf32>
    %c0_i32_23 = arith.constant 0 : i32
    %c2_i32 = arith.constant 2 : i32
    %46 = arith.addi %c0_i32_23, %c2_i32 : i32
    %c1_i32 = arith.constant 1 : i32
    scf.for %arg21 = %c0_i32_23 to %46 step %c1_i32  : i32 {
      %c16_i32 = arith.constant 16 : i32
      %120 = arith.muli %arg21, %c16_i32 : i32
      %121 = tpu.assume_multiple %120, 16 : i32
      %122 = arith.index_cast %121 : i32 to index
      %c0_75 = arith.constant 0 : index
      %123 = vector.load %arg19[%122, %c0_75] : memref<32x96xbf16, #tpu.memory_space<vmem>>, vector<16x8xbf16>
      %124 = arith.index_cast %121 : i32 to index
      %c32 = arith.constant 32 : index
      %125 = vector.load %arg19[%124, %c32] : memref<32x96xbf16, #tpu.memory_space<vmem>>, vector<16x8xbf16>
      %126 = arith.index_cast %121 : i32 to index
      %c64 = arith.constant 64 : index
      %127 = vector.load %arg19[%126, %c64] : memref<32x96xbf16, #tpu.memory_space<vmem>>, vector<16x8xbf16>
      %cst_76 = arith.constant dense<0.000000e+00> : vector<16x16xf32>
      %128 = tpu.matmul %123, %125, %cst_76 {dimension_numbers = #tpu.dot_dimension_numbers<[1], [1], [0], [0], [0, 0, 1, 0], [], []>} : vector<16x8xbf16>, vector<16x8xbf16>, vector<16x16xf32> -> vector<16x16xf32>
      %cst_77 = arith.constant 0.353553385 : f32
      %129 = vector.broadcast %cst_77 : f32 to vector<16x16xf32>
      %130 = arith.mulf %128, %129 : vector<16x16xf32>
      %131 = vector.broadcast %45 : vector<1x16xf32> to vector<16x16xf32>
      %132 = arith.addf %130, %131 : vector<16x16xf32>
      %cst_78 = arith.constant dense<0xFF800000> : vector<16xf32>
      %133 = vector.multi_reduction <maximumf>, %132, %cst_78 [1] : vector<16x16xf32> to vector<16xf32>
      %134 = vector.shape_cast %133 : vector<16xf32> to vector<16x1xf32>
      %135 = vector.broadcast %134 : vector<16x1xf32> to vector<16x16xf32>
      %136 = arith.subf %132, %135 : vector<16x16xf32>
      %137 = math.exp %136 : vector<16x16xf32>
      %cst_79 = arith.constant dense<0.000000e+00> : vector<16xf32>
      %138 = vector.multi_reduction <add>, %137, %cst_79 [1] : vector<16x16xf32> to vector<16xf32>
      %139 = vector.shape_cast %138 : vector<16xf32> to vector<16x1xf32>
      %140 = tpu.reciprocal %139 {approx = true} : vector<16x1xf32> -> vector<16x1xf32>
      %141 = vector.broadcast %140 : vector<16x1xf32> to vector<16x16xf32>
      %142 = arith.mulf %137, %141 : vector<16x16xf32>
      %143 = arith.truncf %142 : vector<16x16xf32> to vector<16x16xbf16>
      %cst_80 = arith.constant dense<0.000000e+00> : vector<16x8xf32>
      %144 = tpu.matmul %143, %127, %cst_80 {dimension_numbers = #tpu.dot_dimension_numbers<[1], [0], [0], [1], [0, 0, 1, 1], [], []>} : vector<16x16xbf16>, vector<16x8xbf16>, vector<16x8xf32> -> vector<16x8xf32>
      %145 = arith.index_cast %121 : i32 to index
      %c8 = arith.constant 8 : index
      %146 = vector.load %arg19[%145, %c8] : memref<32x96xbf16, #tpu.memory_space<vmem>>, vector<16x8xbf16>
      %147 = arith.index_cast %121 : i32 to index
      %c40 = arith.constant 40 : index
      %148 = vector.load %arg19[%147, %c40] : memref<32x96xbf16, #tpu.memory_space<vmem>>, vector<16x8xbf16>
      %149 = arith.index_cast %121 : i32 to index
      %c72 = arith.constant 72 : index
      %150 = vector.load %arg19[%149, %c72] : memref<32x96xbf16, #tpu.memory_space<vmem>>, vector<16x8xbf16>
      %cst_81 = arith.constant dense<0.000000e+00> : vector<16x16xf32>
      %151 = tpu.matmul %146, %148, %cst_81 {dimension_numbers = #tpu.dot_dimension_numbers<[1], [1], [0], [0], [0, 0, 1, 0], [], []>} : vector<16x8xbf16>, vector<16x8xbf16>, vector<16x16xf32> -> vector<16x16xf32>
      %cst_82 = arith.constant 0.353553385 : f32
      %152 = vector.broadcast %cst_82 : f32 to vector<16x16xf32>
      %153 = arith.mulf %151, %152 : vector<16x16xf32>
      %154 = vector.broadcast %45 : vector<1x16xf32> to vector<16x16xf32>
      %155 = arith.addf %153, %154 : vector<16x16xf32>
      %cst_83 = arith.constant dense<0xFF800000> : vector<16xf32>
      %156 = vector.multi_reduction <maximumf>, %155, %cst_83 [1] : vector<16x16xf32> to vector<16xf32>
      %157 = vector.shape_cast %156 : vector<16xf32> to vector<16x1xf32>
      %158 = vector.broadcast %157 : vector<16x1xf32> to vector<16x16xf32>
      %159 = arith.subf %155, %158 : vector<16x16xf32>
      %160 = math.exp %159 : vector<16x16xf32>
      %cst_84 = arith.constant dense<0.000000e+00> : vector<16xf32>
      %161 = vector.multi_reduction <add>, %160, %cst_84 [1] : vector<16x16xf32> to vector<16xf32>
      %162 = vector.shape_cast %161 : vector<16xf32> to vector<16x1xf32>
      %163 = tpu.reciprocal %162 {approx = true} : vector<16x1xf32> -> vector<16x1xf32>
      %164 = vector.broadcast %163 : vector<16x1xf32> to vector<16x16xf32>
      %165 = arith.mulf %160, %164 : vector<16x16xf32>
      %166 = arith.truncf %165 : vector<16x16xf32> to vector<16x16xbf16>
      %cst_85 = arith.constant dense<0.000000e+00> : vector<16x8xf32>
      %167 = tpu.matmul %166, %150, %cst_85 {dimension_numbers = #tpu.dot_dimension_numbers<[1], [0], [0], [1], [0, 0, 1, 1], [], []>} : vector<16x16xbf16>, vector<16x8xbf16>, vector<16x8xf32> -> vector<16x8xf32>
      %168 = tpu.concatenate %144, %167 in 1 : vector<16x8xf32>, vector<16x8xf32> -> vector<16x16xf32>
      %169 = arith.truncf %168 : vector<16x16xf32> to vector<16x16xbf16>
      %170 = arith.index_cast %121 : i32 to index
      %c0_86 = arith.constant 0 : index
      %171 = vector.load %arg20[%170, %c0_86] : memref<32x32xbf16, #tpu.memory_space<vmem>>, vector<16x16xbf16>
      tpu.vector_store %arg20[%170, %c0_86], %169 {strides = array<i32>} : memref<32x32xbf16, #tpu.memory_space<vmem>>, vector<16x16xbf16>,
      %172 = arith.index_cast %121 : i32 to index
      %c16 = arith.constant 16 : index
      %173 = vector.load %arg19[%172, %c16] : memref<32x96xbf16, #tpu.memory_space<vmem>>, vector<16x8xbf16>
      %174 = arith.index_cast %121 : i32 to index
      %c48 = arith.constant 48 : index
      %175 = vector.load %arg19[%174, %c48] : memref<32x96xbf16, #tpu.memory_space<vmem>>, vector<16x8xbf16>
      %176 = arith.index_cast %121 : i32 to index
      %c80 = arith.constant 80 : index
      %177 = vector.load %arg19[%176, %c80] : memref<32x96xbf16, #tpu.memory_space<vmem>>, vector<16x8xbf16>
      %cst_87 = arith.constant dense<0.000000e+00> : vector<16x16xf32>
      %178 = tpu.matmul %173, %175, %cst_87 {dimension_numbers = #tpu.dot_dimension_numbers<[1], [1], [0], [0], [0, 0, 1, 0], [], []>} : vector<16x8xbf16>, vector<16x8xbf16>, vector<16x16xf32> -> vector<16x16xf32>
      %cst_88 = arith.constant 0.353553385 : f32
      %179 = vector.broadcast %cst_88 : f32 to vector<16x16xf32>
      %180 = arith.mulf %178, %179 : vector<16x16xf32>
      %181 = vector.broadcast %45 : vector<1x16xf32> to vector<16x16xf32>
      %182 = arith.addf %180, %181 : vector<16x16xf32>
      %cst_89 = arith.constant dense<0xFF800000> : vector<16xf32>
      %183 = vector.multi_reduction <maximumf>, %182, %cst_89 [1] : vector<16x16xf32> to vector<16xf32>
      %184 = vector.shape_cast %183 : vector<16xf32> to vector<16x1xf32>
      %185 = vector.broadcast %184 : vector<16x1xf32> to vector<16x16xf32>
      %186 = arith.subf %182, %185 : vector<16x16xf32>
      %187 = math.exp %186 : vector<16x16xf32>
      %cst_90 = arith.constant dense<0.000000e+00> : vector<16xf32>
      %188 = vector.multi_reduction <add>, %187, %cst_90 [1] : vector<16x16xf32> to vector<16xf32>
      %189 = vector.shape_cast %188 : vector<16xf32> to vector<16x1xf32>
      %190 = tpu.reciprocal %189 {approx = true} : vector<16x1xf32> -> vector<16x1xf32>
      %191 = vector.broadcast %190 : vector<16x1xf32> to vector<16x16xf32>
      %192 = arith.mulf %187, %191 : vector<16x16xf32>
      %193 = arith.truncf %192 : vector<16x16xf32> to vector<16x16xbf16>
      %cst_91 = arith.constant dense<0.000000e+00> : vector<16x8xf32>
      %194 = tpu.matmul %193, %177, %cst_91 {dimension_numbers = #tpu.dot_dimension_numbers<[1], [0], [0], [1], [0, 0, 1, 1], [], []>} : vector<16x16xbf16>, vector<16x8xbf16>, vector<16x8xf32> -> vector<16x8xf32>
      %195 = arith.index_cast %121 : i32 to index
      %c24 = arith.constant 24 : index
      %196 = vector.load %arg19[%195, %c24] : memref<32x96xbf16, #tpu.memory_space<vmem>>, vector<16x8xbf16>
      %197 = arith.index_cast %121 : i32 to index
      %c56 = arith.constant 56 : index
      %198 = vector.load %arg19[%197, %c56] : memref<32x96xbf16, #tpu.memory_space<vmem>>, vector<16x8xbf16>
      %199 = arith.index_cast %121 : i32 to index
      %c88 = arith.constant 88 : index
      %200 = vector.load %arg19[%199, %c88] : memref<32x96xbf16, #tpu.memory_space<vmem>>, vector<16x8xbf16>
      %cst_92 = arith.constant dense<0.000000e+00> : vector<16x16xf32>
      %201 = tpu.matmul %196, %198, %cst_92 {dimension_numbers = #tpu.dot_dimension_numbers<[1], [1], [0], [0], [0, 0, 1, 0], [], []>} : vector<16x8xbf16>, vector<16x8xbf16>, vector<16x16xf32> -> vector<16x16xf32>
      %cst_93 = arith.constant 0.353553385 : f32
      %202 = vector.broadcast %cst_93 : f32 to vector<16x16xf32>
      %203 = arith.mulf %201, %202 : vector<16x16xf32>
      %204 = vector.broadcast %45 : vector<1x16xf32> to vector<16x16xf32>
      %205 = arith.addf %203, %204 : vector<16x16xf32>
      %cst_94 = arith.constant dense<0xFF800000> : vector<16xf32>
      %206 = vector.multi_reduction <maximumf>, %205, %cst_94 [1] : vector<16x16xf32> to vector<16xf32>
      %207 = vector.shape_cast %206 : vector<16xf32> to vector<16x1xf32>
      %208 = vector.broadcast %207 : vector<16x1xf32> to vector<16x16xf32>
      %209 = arith.subf %205, %208 : vector<16x16xf32>
      %210 = math.exp %209 : vector<16x16xf32>
      %cst_95 = arith.constant dense<0.000000e+00> : vector<16xf32>
      %211 = vector.multi_reduction <add>, %210, %cst_95 [1] : vector<16x16xf32> to vector<16xf32>
      %212 = vector.shape_cast %211 : vector<16xf32> to vector<16x1xf32>
      %213 = tpu.reciprocal %212 {approx = true} : vector<16x1xf32> -> vector<16x1xf32>
      %214 = vector.broadcast %213 : vector<16x1xf32> to vector<16x16xf32>
      %215 = arith.mulf %210, %214 : vector<16x16xf32>
      %216 = arith.truncf %215 : vector<16x16xf32> to vector<16x16xbf16>
      %cst_96 = arith.constant dense<0.000000e+00> : vector<16x8xf32>
      %217 = tpu.matmul %216, %200, %cst_96 {dimension_numbers = #tpu.dot_dimension_numbers<[1], [0], [0], [1], [0, 0, 1, 1], [], []>} : vector<16x16xbf16>, vector<16x8xbf16>, vector<16x8xf32> -> vector<16x8xf32>
      %218 = tpu.concatenate %194, %217 in 1 : vector<16x8xf32>, vector<16x8xf32> -> vector<16x16xf32>
      %219 = arith.truncf %218 : vector<16x16xf32> to vector<16x16xbf16>
      %220 = arith.index_cast %121 : i32 to index
      %c16_97 = arith.constant 16 : index
      %221 = vector.load %arg20[%220, %c16_97] : memref<32x32xbf16, #tpu.memory_space<vmem>>, vector<16x16xbf16>
      tpu.vector_store %arg20[%220, %c16_97], %219 {strides = array<i32>} : memref<32x32xbf16, #tpu.memory_space<vmem>>, vector<16x16xbf16>,
    }
    %c2_i32_24 = arith.constant 2 : i32
    %c0_25 = arith.constant 0 : index
    %c0_26 = arith.constant 0 : index
    %47 = vector.load %arg18[%c0_25, %c0_26] : memref<32x32xf32, #tpu.memory_space<vmem>>, vector<32x32xf32>
    %c0_27 = arith.constant 0 : index
    %c0_28 = arith.constant 0 : index
    %48 = vector.load %arg20[%c0_27, %c0_28] : memref<32x32xbf16, #tpu.memory_space<vmem>>, vector<32x32xbf16>
    %c0_29 = arith.constant 0 : index
    %c0_30 = arith.constant 0 : index
    %c0_31 = arith.constant 0 : index
    %49 = vector.load %arg9[%c0_29, %c0_30, %c0_31] : memref<1x32x32xbf16, #tpu.memory_space<vmem>>, vector<1x32x32xbf16>
    %50 = vector.shape_cast %49 : vector<1x32x32xbf16> to vector<32x32xbf16>
    %cst_32 = arith.constant dense<0.000000e+00> : vector<32x32xf32>
    %51 = tpu.matmul %48, %50, %cst_32 {dimension_numbers = #tpu.dot_dimension_numbers<[1], [0], [0], [1], [0, 0, 1, 1], [], []>} : vector<32x32xbf16>, vector<32x32xbf16>, vector<32x32xf32> -> vector<32x32xf32>
    %52 = arith.addf %47, %51 : vector<32x32xf32>
    %c0_33 = arith.constant 0 : index
    %c0_34 = arith.constant 0 : index
    %c0_35 = arith.constant 0 : index
    %53 = vector.load %arg10[%c0_33, %c0_34, %c0_35] : memref<1x1x32xf32, #tpu.memory_space<vmem>>, vector<1x1x32xf32>
    %54 = vector.shape_cast %53 : vector<1x1x32xf32> to vector<1x32xf32>
    %55 = vector.broadcast %54 : vector<1x32xf32> to vector<32x32xf32>
    %56 = arith.addf %52, %55 : vector<32x32xf32>
    %c0_36 = arith.constant 0 : index
    %c0_37 = arith.constant 0 : index
    %57 = vector.load %arg18[%c0_36, %c0_37] : memref<32x32xf32, #tpu.memory_space<vmem>>, vector<32x32xf32>
    tpu.vector_store %arg18[%c0_36, %c0_37], %56 {strides = array<i32>} : memref<32x32xf32, #tpu.memory_space<vmem>>, vector<32x32xf32>,
    %c0_38 = arith.constant 0 : index
    %c0_39 = arith.constant 0 : index
    %58 = vector.load %arg18[%c0_38, %c0_39] : memref<32x32xf32, #tpu.memory_space<vmem>>, vector<32x32xf32>
    %c0_40 = arith.constant 0 : index
    %c0_41 = arith.constant 0 : index
    %c0_42 = arith.constant 0 : index
    %59 = vector.load %arg11[%c0_40, %c0_41, %c0_42] : memref<1x1x32xf32, #tpu.memory_space<vmem>>, vector<1x1x32xf32>
    %60 = vector.shape_cast %59 : vector<1x1x32xf32> to vector<1x32xf32>
    %c0_43 = arith.constant 0 : index
    %c0_44 = arith.constant 0 : index
    %c0_45 = arith.constant 0 : index
    %61 = vector.load %arg12[%c0_43, %c0_44, %c0_45] : memref<1x1x32xf32, #tpu.memory_space<vmem>>, vector<1x1x32xf32>
    %62 = vector.shape_cast %61 : vector<1x1x32xf32> to vector<1x32xf32>
    %cst_46 = arith.constant dense<0.000000e+00> : vector<32xf32>
    %63 = vector.multi_reduction <add>, %58, %cst_46 [1] : vector<32x32xf32> to vector<32xf32>
    %64 = vector.shape_cast %63 : vector<32xf32> to vector<32x1xf32>
    %cst_47 = arith.constant 3.200000e+01 : f32
    %65 = vector.broadcast %cst_47 : f32 to vector<32x1xf32>
    %66 = arith.divf %64, %65 : vector<32x1xf32>
    %67 = vector.broadcast %66 : vector<32x1xf32> to vector<32x32xf32>
    %68 = arith.subf %58, %67 : vector<32x32xf32>
    %69 = arith.mulf %68, %68 : vector<32x32xf32>
    %cst_48 = arith.constant dense<0.000000e+00> : vector<32xf32>
    %70 = vector.multi_reduction <add>, %69, %cst_48 [1] : vector<32x32xf32> to vector<32xf32>
    %71 = vector.shape_cast %70 : vector<32xf32> to vector<32x1xf32>
    %cst_49 = arith.constant 3.200000e+01 : f32
    %72 = vector.broadcast %cst_49 : f32 to vector<32x1xf32>
    %73 = arith.divf %71, %72 : vector<32x1xf32>
    %74 = vector.broadcast %66 : vector<32x1xf32> to vector<32x32xf32>
    %75 = arith.subf %58, %74 : vector<32x32xf32>
    %cst_50 = arith.constant 9.99999997E-7 : f32
    %76 = vector.broadcast %cst_50 : f32 to vector<32x1xf32>
    %77 = arith.addf %73, %76 : vector<32x1xf32>
    %78 = math.rsqrt %77 : vector<32x1xf32>
    %79 = vector.broadcast %78 : vector<32x1xf32> to vector<32x32xf32>
    %80 = arith.mulf %75, %79 : vector<32x32xf32>
    %81 = vector.broadcast %60 : vector<1x32xf32> to vector<32x32xf32>
    %82 = arith.mulf %80, %81 : vector<32x32xf32>
    %83 = vector.broadcast %62 : vector<1x32xf32> to vector<32x32xf32>
    %84 = arith.addf %82, %83 : vector<32x32xf32>
    %85 = arith.truncf %84 : vector<32x32xf32> to vector<32x32xbf16>
    %c0_51 = arith.constant 0 : index
    %c0_52 = arith.constant 0 : index
    %c0_53 = arith.constant 0 : index
    %86 = vector.load %arg13[%c0_51, %c0_52, %c0_53] : memref<1x32x128xbf16, #tpu.memory_space<vmem>>, vector<1x32x128xbf16>
    %87 = vector.shape_cast %86 : vector<1x32x128xbf16> to vector<32x128xbf16>
    %cst_54 = arith.constant dense<0.000000e+00> : vector<32x128xf32>
    %88 = tpu.matmul %85, %87, %cst_54 {dimension_numbers = #tpu.dot_dimension_numbers<[1], [0], [0], [1], [0, 0, 1, 1], [], []>} : vector<32x32xbf16>, vector<32x128xbf16>, vector<32x128xf32> -> vector<32x128xf32>
    %c0_55 = arith.constant 0 : index
    %c0_56 = arith.constant 0 : index
    %c0_57 = arith.constant 0 : index
    %89 = vector.load %arg14[%c0_55, %c0_56, %c0_57] : memref<1x1x128xf32, #tpu.memory_space<vmem>>, vector<1x1x128xf32>
    %90 = vector.shape_cast %89 : vector<1x1x128xf32> to vector<1x128xf32>
    %91 = vector.broadcast %90 : vector<1x128xf32> to vector<32x128xf32>
    %92 = arith.addf %88, %91 : vector<32x128xf32>
    %cst_58 = arith.constant 5.000000e-01 : f32
    %93 = vector.broadcast %cst_58 : f32 to vector<32x128xf32>
    %94 = arith.mulf %93, %92 : vector<32x128xf32>
    %cst_59 = arith.constant 4.471500e-02 : f32
    %95 = vector.broadcast %cst_59 : f32 to vector<32x128xf32>
    %96 = arith.mulf %95, %92 : vector<32x128xf32>
    %97 = arith.mulf %96, %92 : vector<32x128xf32>
    %98 = arith.mulf %97, %92 : vector<32x128xf32>
    %99 = arith.addf %92, %98 : vector<32x128xf32>
    %cst_60 = arith.constant 0.797884583 : f32
    %100 = vector.broadcast %cst_60 : f32 to vector<32x128xf32>
    %101 = arith.mulf %100, %99 : vector<32x128xf32>
    %102 = math.tanh %101 : vector<32x128xf32>
    %cst_61 = arith.constant 1.000000e+00 : f32
    %103 = vector.broadcast %cst_61 : f32 to vector<32x128xf32>
    %104 = arith.addf %103, %102 : vector<32x128xf32>
    %105 = arith.mulf %94, %104 : vector<32x128xf32>
    %c0_62 = arith.constant 0 : index
    %c0_63 = arith.constant 0 : index
    %106 = vector.load %arg18[%c0_62, %c0_63] : memref<32x32xf32, #tpu.memory_space<vmem>>, vector<32x32xf32>
    %107 = arith.truncf %105 : vector<32x128xf32> to vector<32x128xbf16>
    %c0_64 = arith.constant 0 : index
    %c0_65 = arith.constant 0 : index
    %c0_66 = arith.constant 0 : index
    %108 = vector.load %arg15[%c0_64, %c0_65, %c0_66] : memref<1x128x32xbf16, #tpu.memory_space<vmem>>, vector<1x128x32xbf16>
    %109 = vector.shape_cast %108 : vector<1x128x32xbf16> to vector<128x32xbf16>
    %cst_67 = arith.constant dense<0.000000e+00> : vector<32x32xf32>
    %110 = tpu.matmul %107, %109, %cst_67 {dimension_numbers = #tpu.dot_dimension_numbers<[1], [0], [0], [1], [0, 0, 1, 1], [], []>} : vector<32x128xbf16>, vector<128x32xbf16>, vector<32x32xf32> -> vector<32x32xf32>
    %111 = arith.addf %106, %110 : vector<32x32xf32>
    %c0_68 = arith.constant 0 : index
    %c0_69 = arith.constant 0 : index
    %c0_70 = arith.constant 0 : index
    %112 = vector.load %arg16[%c0_68, %c0_69, %c0_70] : memref<1x1x32xf32, #tpu.memory_space<vmem>>, vector<1x1x32xf32>
    %113 = vector.shape_cast %112 : vector<1x1x32xf32> to vector<1x32xf32>
    %114 = vector.broadcast %113 : vector<1x32xf32> to vector<32x32xf32>
    %115 = arith.addf %111, %114 : vector<32x32xf32>
    %c0_71 = arith.constant 0 : index
    %c0_72 = arith.constant 0 : index
    %116 = vector.load %arg18[%c0_71, %c0_72] : memref<32x32xf32, #tpu.memory_space<vmem>>, vector<32x32xf32>
    tpu.vector_store %arg18[%c0_71, %c0_72], %115 {strides = array<i32>} : memref<32x32xf32, #tpu.memory_space<vmem>>, vector<32x32xf32>,
    %c1_i32_73 = arith.constant 1 : i32
    %117 = arith.cmpi eq, %arg1, %c1_i32_73 : i32
    %118 = arith.extui %117 : i1 to i32
    %c0_i32_74 = arith.constant 0 : i32
    %119 = arith.cmpi ne, %118, %c0_i32_74 : i32
    scf.if %119 {
      %c0_75 = arith.constant 0 : index
      %c0_76 = arith.constant 0 : index
      %120 = vector.load %arg18[%c0_75, %c0_76] : memref<32x32xf32, #tpu.memory_space<vmem>>, vector<32x32xf32>
      %121 = arith.mulf %120, %120 : vector<32x32xf32>
      %cst_77 = arith.constant dense<0.000000e+00> : vector<32xf32>
      %122 = vector.multi_reduction <add>, %121, %cst_77 [1] : vector<32x32xf32> to vector<32xf32>
      %123 = vector.shape_cast %122 : vector<32xf32> to vector<32x1xf32>
      %cst_78 = arith.constant 1.000000e-24 : f32
      %124 = vector.broadcast %cst_78 : f32 to vector<32x1xf32>
      %125 = arith.maximumf %123, %124 : vector<32x1xf32>
      %126 = math.rsqrt %125 : vector<32x1xf32>
      %127 = vector.broadcast %126 : vector<32x1xf32> to vector<32x32xf32>
      %128 = arith.mulf %120, %127 : vector<32x32xf32>
      %129 = vector.shape_cast %128 : vector<32x32xf32> to vector<2x16x32xf32>
      %c0_79 = arith.constant 0 : index
      %c0_80 = arith.constant 0 : index
      %c0_81 = arith.constant 0 : index
      %130 = vector.load %arg17[%c0_79, %c0_80, %c0_81] : memref<2x16x32xf32, #tpu.memory_space<vmem>>, vector<2x16x32xf32>
      tpu.vector_store %arg17[%c0_79, %c0_80, %c0_81], %129 {strides = array<i32>} : memref<2x16x32xf32, #tpu.memory_space<vmem>>, vector<2x16x32xf32>,
    } else {
    }
    return
  }
  func.func @transform_0(%arg0: i32, %arg1: i32) -> (i32, i32, i32) {
    %c0_i32 = arith.constant 0 : i32
    %c0_i32_0 = arith.constant 0 : i32
    %c0_i32_1 = arith.constant 0 : i32
    return %arg0, %c0_i32, %c0_i32_0 : i32, i32, i32
  }
  func.func @transform_1(%arg0: i32, %arg1: i32) -> (i32, i32) {
    %c0_i32 = arith.constant 0 : i32
    %c0_i32_0 = arith.constant 0 : i32
    %c0_i32_1 = arith.constant 0 : i32
    return %c0_i32, %c0_i32_0 : i32, i32
  }
  func.func @transform_2(%arg0: i32, %arg1: i32) -> (i32, i32) {
    %c0_i32 = arith.constant 0 : i32
    %c0_i32_0 = arith.constant 0 : i32
    %c0_i32_1 = arith.constant 0 : i32
    return %c0_i32, %c0_i32_0 : i32, i32
  }
  func.func @transform_3(%arg0: i32, %arg1: i32) -> (i32, i32, i32) {
    %c0_i32 = arith.constant 0 : i32
    %c0_i32_0 = arith.constant 0 : i32
    %c0_i32_1 = arith.constant 0 : i32
    return %arg1, %c0_i32, %c0_i32_0 : i32, i32, i32
  }
  func.func @transform_4(%arg0: i32, %arg1: i32) -> (i32, i32, i32) {
    %c0_i32 = arith.constant 0 : i32
    %c0_i32_0 = arith.constant 0 : i32
    %c0_i32_1 = arith.constant 0 : i32
    return %arg1, %c0_i32, %c0_i32_0 : i32, i32, i32
  }
  func.func @transform_5(%arg0: i32, %arg1: i32) -> (i32, i32, i32) {
    %c0_i32 = arith.constant 0 : i32
    %c0_i32_0 = arith.constant 0 : i32
    %c0_i32_1 = arith.constant 0 : i32
    return %arg1, %c0_i32, %c0_i32_0 : i32, i32, i32
  }
  func.func @transform_6(%arg0: i32, %arg1: i32) -> (i32, i32, i32) {
    %c0_i32 = arith.constant 0 : i32
    %c0_i32_0 = arith.constant 0 : i32
    %c0_i32_1 = arith.constant 0 : i32
    return %arg1, %c0_i32, %c0_i32_0 : i32, i32, i32
  }
  func.func @transform_7(%arg0: i32, %arg1: i32) -> (i32, i32, i32) {
    %c0_i32 = arith.constant 0 : i32
    %c0_i32_0 = arith.constant 0 : i32
    %c0_i32_1 = arith.constant 0 : i32
    return %arg1, %c0_i32, %c0_i32_0 : i32, i32, i32
  }
  func.func @transform_8(%arg0: i32, %arg1: i32) -> (i32, i32, i32) {
    %c0_i32 = arith.constant 0 : i32
    %c0_i32_0 = arith.constant 0 : i32
    %c0_i32_1 = arith.constant 0 : i32
    return %arg1, %c0_i32, %c0_i32_0 : i32, i32, i32
  }
  func.func @transform_9(%arg0: i32, %arg1: i32) -> (i32, i32, i32) {
    %c0_i32 = arith.constant 0 : i32
    %c0_i32_0 = arith.constant 0 : i32
    %c0_i32_1 = arith.constant 0 : i32
    return %arg1, %c0_i32, %c0_i32_0 : i32, i32, i32
  }
  func.func @transform_10(%arg0: i32, %arg1: i32) -> (i32, i32, i32) {
    %c0_i32 = arith.constant 0 : i32
    %c0_i32_0 = arith.constant 0 : i32
    %c0_i32_1 = arith.constant 0 : i32
    return %arg1, %c0_i32, %c0_i32_0 : i32, i32, i32
  }
  func.func @transform_11(%arg0: i32, %arg1: i32) -> (i32, i32, i32) {
    %c0_i32 = arith.constant 0 : i32
    %c0_i32_0 = arith.constant 0 : i32
    %c0_i32_1 = arith.constant 0 : i32
    return %arg1, %c0_i32, %c0_i32_0 : i32, i32, i32
  }
  func.func @transform_12(%arg0: i32, %arg1: i32) -> (i32, i32, i32) {
    %c0_i32 = arith.constant 0 : i32
    %c0_i32_0 = arith.constant 0 : i32
    %c0_i32_1 = arith.constant 0 : i32
    return %arg1, %c0_i32, %c0_i32_0 : i32, i32, i32
  }
  func.func @transform_13(%arg0: i32, %arg1: i32) -> (i32, i32, i32) {
    %c0_i32 = arith.constant 0 : i32
    %c0_i32_0 = arith.constant 0 : i32
    %c0_i32_1 = arith.constant 0 : i32
    return %arg1, %c0_i32, %c0_i32_0 : i32, i32, i32
  }
  func.func @transform_14(%arg0: i32, %arg1: i32) -> (i32, i32, i32) {
    %c0_i32 = arith.constant 0 : i32
    %c0_i32_0 = arith.constant 0 : i32
    %c0_i32_1 = arith.constant 0 : i32
    return %arg1, %c0_i32, %c0_i32_0 : i32, i32, i32
  }
  func.func @transform_15(%arg0: i32, %arg1: i32) -> (i32, i32, i32) {
    %c0_i32 = arith.constant 0 : i32
    %c0_i32_0 = arith.constant 0 : i32
    %c0_i32_1 = arith.constant 0 : i32
    return %arg0, %c0_i32, %c0_i32_0 : i32, i32, i32
  }
}

</mosaic_0001>

<llo_original>
// kernel: tpu_custom_call.1
$region0: #{tpu_custom_call.1}
  #allocation0 [shape = 'u32[]', space=smem, size = 0x4, offset = 0x4, fixed_abs, tag = 'smem constant byte address 0x4 - core index']
  #allocation1 [shape = 'u32[144,128]{1,0:T(1,128)}', space=vmem, size = 0x12000, scoped, tag = 'internal scratch']
  #allocation2 [shape = 'f32[32,32]{1,0:T(8,128)}', space=vmem, size = 0x4000, scoped, tag = 'scratch operand']
  #allocation3 [shape = 'bf16[32,96]{1,0:T(16,128)(2,1)}', space=vmem, size = 0x2000, scoped, tag = 'scratch operand']
  #allocation4 [shape = 'bf16[32,32]{1,0:T(16,128)(2,1)}', space=vmem, size = 0x2000, scoped, tag = 'scratch operand']
  %s0 = inlined_call_operand.vmem [shape: bf16[2,16,256], index: 0, kind: input, shape index: {}]
  %s1 = inlined_call_operand.vmem [shape: bf16[256,32], index: 1, kind: input, shape index: {}]
  %s2 = inlined_call_operand.vmem [shape: f32[16,32], index: 2, kind: input, shape index: {}]
  %s3 = inlined_call_operand.vmem [shape: f32[2,1,32], index: 3, kind: input, shape index: {}]
  %s4 = inlined_call_operand.vmem [shape: f32[2,1,32], index: 4, kind: input, shape index: {}]
  %s5 = inlined_call_operand.vmem [shape: bf16[2,32,96], index: 5, kind: input, shape index: {}]
  %s6 = inlined_call_operand.vmem [shape: f32[2,1,96], index: 6, kind: input, shape index: {}]
  %s7 = inlined_call_operand.vmem [shape: bf16[2,32,32], index: 7, kind: input, shape index: {}]
  %s8 = inlined_call_operand.vmem [shape: f32[2,1,32], index: 8, kind: input, shape index: {}]
  %s9 = inlined_call_operand.vmem [shape: f32[2,1,32], index: 9, kind: input, shape index: {}]
  %s10 = inlined_call_operand.vmem [shape: f32[2,1,32], index: 10, kind: input, shape index: {}]
  %s11 = inlined_call_operand.vmem [shape: bf16[2,32,128], index: 11, kind: input, shape index: {}]
  %s12 = inlined_call_operand.vmem [shape: f32[2,1,128], index: 12, kind: input, shape index: {}]
  %s13 = inlined_call_operand.vmem [shape: bf16[2,128,32], index: 13, kind: input, shape index: {}]
  %s14 = inlined_call_operand.vmem [shape: f32[2,1,32], index: 14, kind: input, shape index: {}]
  %s15 = inlined_call_operand.hbm [shape: f32[2,16,32], index: 15, kind: output, shape index: {}]
  %s16 = sld [smem:[#allocation0]]
  $region108: #{tpu_custom_call.1} parent=0
    _
  %s18 = ssub.s32 1, %s16
  %s19 = scalar_select 0, %s18, %s16
  $region1: #{tpu_custom_call.1} parent=0
    #allocation5 [shape = 'u8[16384]{0}', space=vmem, size = 0x4000, scoped, tag = 'output window, operand 0, single buffered']
    #allocation6 [shape = 's32[2]{0}', space=sflag, size = 0x8, scoped, tag = 'scoped memory for tpu_custom_call.1']
    %20 = vsyncpa [#allocation6], 0
    loop: start=0, step=1, limit=4
    $region2: #{tpu_custom_call.1} parent=1 // loop_pre_header
      _
    $region3: #{tpu_custom_call.1} parent=1 // loop_header
      %s22 = sphi 0, %s26
      %p23 = scmp.ge.s32.totalorder %s22, 4
      %s29 = sphi 0, %s41
      %s30 = sphi 0, %s37
      %s31 = sphi 0, %s29
      %s32 = sphi 0, %s30
      %s33 = sphi 0, %s31
      %s34 = sphi 0, %s32
      %s44 = sphi 0, %s46
      %s47 = sphi 0, %s44
      %s48 = sphi 0, %s47
      %s64 = sphi 0, %s48
      %s68 = sphi 0, %s68
      %s70 = sphi 0, %s68
      %s71 = sphi 0, %s70
      %s85 = sphi 0, %s71
      %s89 = sphi 0, %s89
      %s91 = sphi 0, %s89
      %s92 = sphi 0, %s91
      %s106 = sphi 0, %s92
      %s112 = sphi 0, %s114
      %s115 = sphi 0, %s112
      %s116 = sphi 0, %s115
      %s132 = sphi 0, %s116
      %s138 = sphi 0, %s140
      %s141 = sphi 0, %s138
      %s142 = sphi 0, %s141
      %s158 = sphi 0, %s142
      %s164 = sphi 0, %s166
      %s167 = sphi 0, %s164
      %s168 = sphi 0, %s167
      %s184 = sphi 0, %s168
      %s190 = sphi 0, %s192
      %s193 = sphi 0, %s190
      %s194 = sphi 0, %s193
      %s210 = sphi 0, %s194
      %s216 = sphi 0, %s218
      %s219 = sphi 0, %s216
      %s220 = sphi 0, %s219
      %s236 = sphi 0, %s220
      %s242 = sphi 0, %s244
      %s245 = sphi 0, %s242
      %s246 = sphi 0, %s245
      %s262 = sphi 0, %s246
      %s268 = sphi 0, %s270
      %s271 = sphi 0, %s268
      %s272 = sphi 0, %s271
      %s288 = sphi 0, %s272
      %s294 = sphi 0, %s296
      %s297 = sphi 0, %s294
      %s298 = sphi 0, %s297
      %s314 = sphi 0, %s298
      %s320 = sphi 0, %s322
      %s323 = sphi 0, %s320
      %s324 = sphi 0, %s323
      %s340 = sphi 0, %s324
      %s346 = sphi 0, %s348
      %s349 = sphi 0, %s346
      %s350 = sphi 0, %s349
      %s366 = sphi 0, %s350
      %s372 = sphi 0, %s374
      %s375 = sphi 0, %s372
      %s376 = sphi 0, %s375
      %s392 = sphi 0, %s376
      %s398 = sphi 0, %s400
      %s401 = sphi 0, %s398
      %s402 = sphi 0, %s401
      %s418 = sphi 0, %s402
      %s424 = sphi 0, %s426
      %s427 = sphi 0, %s424
      %s428 = sphi 0, %s427
      %s444 = sphi 0, %s428
    $region4: #{tpu_custom_call.1} parent=1 // loop_header_branch
      %25 = sbr.rel (%p23) target = $region8
    $region5: #{tpu_custom_call.1} parent=1 // loop_body
      %s27 = ssub.s32 %s22, 1
      %s28 = ssub.s32 %s22, 2
      %s35 = sadd.s32 1, %s30
      %p36 = scmp.ge.s32.totalorder %s35, 2
      %s37 = scalar_select %p36, 0, %s35
      %s38 = sadd.s32 1, %s29
      %s39 = scalar_select %p36, %s38, %s29
      %p40 = scmp.ge.s32.totalorder %s39, 1
      %s41 = scalar_select %p40, 0, %s39
      %s42 = ssub.s32 %s29, %s41
      %p43 = scmp.eq.s32.totalorder %s42, 0
      %s45 = sadd.s32 %s44, 1
      %s46 = scalar_select %p43, %s44, %s45
      %p49 = pneg %p43
      %p50 = scmp.eq.s32.totalorder %s22, 1
      %p51 = por %p49, %p50
      %p52 = scmp.ne.s32.totalorder %s44, %s47
      %p53 = scmp.eq.s32.totalorder %s22, 0
      %p54 = por %p52, %p53
      %p55 = scmp.ne.s32.totalorder %s44, %s47
      %p56 = scmp.eq.s32.totalorder %s27, 1
      %p57 = por %p55, %p56
      %p58 = scmp.ne.s32.totalorder %s47, %s48
      %p59 = scmp.eq.s32.totalorder %s27, 0
      %p60 = por %p58, %p59
      %p61 = scmp.ne.s32.totalorder %s47, %s48
      %p62 = scmp.eq.s32.totalorder %s28, 1
      %p63 = por %p61, %p62
      %p65 = scmp.ne.s32.totalorder %s48, %s64
      %p66 = scmp.eq.s32.totalorder %s28, 0
      %p67 = por %p65, %p66
      %s69 = sadd.s32 %s68, 1
      %p72 = scmp.eq.s32.totalorder %s22, 1
      %p73 = scmp.ne.s32.totalorder %s68, %s70
      %p74 = scmp.eq.s32.totalorder %s22, 0
      %p75 = por %p73, %p74
      %p76 = scmp.ne.s32.totalorder %s68, %s70
      %p77 = scmp.eq.s32.totalorder %s27, 1
      %p78 = por %p76, %p77
      %p79 = scmp.ne.s32.totalorder %s70, %s71
      %p80 = scmp.eq.s32.totalorder %s27, 0
      %p81 = por %p79, %p80
      %p82 = scmp.ne.s32.totalorder %s70, %s71
      %p83 = scmp.eq.s32.totalorder %s28, 1
      %p84 = por %p82, %p83
      %p86 = scmp.ne.s32.totalorder %s71, %s85
      %p87 = scmp.eq.s32.totalorder %s28, 0
      %p88 = por %p86, %p87
      %s90 = sadd.s32 %s89, 1
      %p93 = scmp.eq.s32.totalorder %s22, 1
      %p94 = scmp.ne.s32.totalorder %s89, %s91
      %p95 = scmp.eq.s32.totalorder %s22, 0
      %p96 = por %p94, %p95
      %p97 = scmp.ne.s32.totalorder %s89, %s91
      %p98 = scmp.eq.s32.totalorder %s27, 1
      %p99 = por %p97, %p98
      %p100 = scmp.ne.s32.totalorder %s91, %s92
      %p101 = scmp.eq.s32.totalorder %s27, 0
      %p102 = por %p100, %p101
      %p103 = scmp.ne.s32.totalorder %s91, %s92
      %p104 = scmp.eq.s32.totalorder %s28, 1
      %p105 = por %p103, %p104
      %p107 = scmp.ne.s32.totalorder %s92, %s106
      %p108 = scmp.eq.s32.totalorder %s28, 0
      %p109 = por %p107, %p108
      %s110 = ssub.s32 %s30, %s37
      %p111 = scmp.eq.s32.totalorder %s110, 0
      %s113 = sadd.s32 %s112, 1
      %s114 = scalar_select %p111, %s112, %s113
      %p117 = pneg %p111
      %p118 = scmp.eq.s32.totalorder %s22, 1
      %p119 = por %p117, %p118
      %p120 = scmp.ne.s32.totalorder %s112, %s115
      %p121 = scmp.eq.s32.totalorder %s22, 0
      %p122 = por %p120, %p121
      %p123 = scmp.ne.s32.totalorder %s112, %s115
      %p124 = scmp.eq.s32.totalorder %s27, 1
      %p125 = por %p123, %p124
      %p126 = scmp.ne.s32.totalorder %s115, %s116
      %p127 = scmp.eq.s32.totalorder %s27, 0
      %p128 = por %p126, %p127
      %p129 = scmp.ne.s32.totalorder %s115, %s116
      %p130 = scmp.eq.s32.totalorder %s28, 1
      %p131 = por %p129, %p130
      %p133 = scmp.ne.s32.totalorder %s116, %s132
      %p134 = scmp.eq.s32.totalorder %s28, 0
      %p135 = por %p133, %p134
      %s136 = ssub.s32 %s30, %s37
      %p137 = scmp.eq.s32.totalorder %s136, 0
      %s139 = sadd.s32 %s138, 1
      %s140 = scalar_select %p137, %s138, %s139
      %p143 = pneg %p137
      %p144 = scmp.eq.s32.totalorder %s22, 1
      %p145 = por %p143, %p144
      %p146 = scmp.ne.s32.totalorder %s138, %s141
      %p147 = scmp.eq.s32.totalorder %s22, 0
      %p148 = por %p146, %p147
      %p149 = scmp.ne.s32.totalorder %s138, %s141
      %p150 = scmp.eq.s32.totalorder %s27, 1
      %p151 = por %p149, %p150
      %p152 = scmp.ne.s32.totalorder %s141, %s142
      %p153 = scmp.eq.s32.totalorder %s27, 0
      %p154 = por %p152, %p153
      %p155 = scmp.ne.s32.totalorder %s141, %s142
      %p156 = scmp.eq.s32.totalorder %s28, 1
      %p157 = por %p155, %p156
      %p159 = scmp.ne.s32.totalorder %s142, %s158
      %p160 = scmp.eq.s32.totalorder %s28, 0
      %p161 = por %p159, %p160
      %s162 = ssub.s32 %s30, %s37
      %p163 = scmp.eq.s32.totalorder %s162, 0
      %s165 = sadd.s32 %s164, 1
      %s166 = scalar_select %p163, %s164, %s165
      %p169 = pneg %p163
      %p170 = scmp.eq.s32.totalorder %s22, 1
      %p171 = por %p169, %p170
      %p172 = scmp.ne.s32.totalorder %s164, %s167
      %p173 = scmp.eq.s32.totalorder %s22, 0
      %p174 = por %p172, %p173
      %p175 = scmp.ne.s32.totalorder %s164, %s167
      %p176 = scmp.eq.s32.totalorder %s27, 1
      %p177 = por %p175, %p176
      %p178 = scmp.ne.s32.totalorder %s167, %s168
      %p179 = scmp.eq.s32.totalorder %s27, 0
      %p180 = por %p178, %p179
      %p181 = scmp.ne.s32.totalorder %s167, %s168
      %p182 = scmp.eq.s32.totalorder %s28, 1
      %p183 = por %p181, %p182
      %p185 = scmp.ne.s32.totalorder %s168, %s184
      %p186 = scmp.eq.s32.totalorder %s28, 0
      %p187 = por %p185, %p186
      %s188 = ssub.s32 %s30, %s37
      %p189 = scmp.eq.s32.totalorder %s188, 0
      %s191 = sadd.s32 %s190, 1
      %s192 = scalar_select %p189, %s190, %s191
      %p195 = pneg %p189
      %p196 = scmp.eq.s32.totalorder %s22, 1
      %p197 = por %p195, %p196
      %p198 = scmp.ne.s32.totalorder %s190, %s193
      %p199 = scmp.eq.s32.totalorder %s22, 0
      %p200 = por %p198, %p199
      %p201 = scmp.ne.s32.totalorder %s190, %s193
      %p202 = scmp.eq.s32.totalorder %s27, 1
      %p203 = por %p201, %p202
      %p204 = scmp.ne.s32.totalorder %s193, %s194
      %p205 = scmp.eq.s32.totalorder %s27, 0
      %p206 = por %p204, %p205
      %p207 = scmp.ne.s32.totalorder %s193, %s194
      %p208 = scmp.eq.s32.totalorder %s28, 1
      %p209 = por %p207, %p208
      %p211 = scmp.ne.s32.totalorder %s194, %s210
      %p212 = scmp.eq.s32.totalorder %s28, 0
      %p213 = por %p211, %p212
      %s214 = ssub.s32 %s30, %s37
      %p215 = scmp.eq.s32.totalorder %s214, 0
      %s217 = sadd.s32 %s216, 1
      %s218 = scalar_select %p215, %s216, %s217
      %p221 = pneg %p215
      %p222 = scmp.eq.s32.totalorder %s22, 1
      %p223 = por %p221, %p222
      %p224 = scmp.ne.s32.totalorder %s216, %s219
      %p225 = scmp.eq.s32.totalorder %s22, 0
      %p226 = por %p224, %p225
      %p227 = scmp.ne.s32.totalorder %s216, %s219
      %p228 = scmp.eq.s32.totalorder %s27, 1
      %p229 = por %p227, %p228
      %p230 = scmp.ne.s32.totalorder %s219, %s220
      %p231 = scmp.eq.s32.totalorder %s27, 0
      %p232 = por %p230, %p231
      %p233 = scmp.ne.s32.totalorder %s219, %s220
      %p234 = scmp.eq.s32.totalorder %s28, 1
      %p235 = por %p233, %p234
      %p237 = scmp.ne.s32.totalorder %s220, %s236
      %p238 = scmp.eq.s32.totalorder %s28, 0
      %p239 = por %p237, %p238
      %s240 = ssub.s32 %s30, %s37
      %p241 = scmp.eq.s32.totalorder %s240, 0
      %s243 = sadd.s32 %s242, 1
      %s244 = scalar_select %p241, %s242, %s243
      %p247 = pneg %p241
      %p248 = scmp.eq.s32.totalorder %s22, 1
      %p249 = por %p247, %p248
      %p250 = scmp.ne.s32.totalorder %s242, %s245
      %p251 = scmp.eq.s32.totalorder %s22, 0
      %p252 = por %p250, %p251
      %p253 = scmp.ne.s32.totalorder %s242, %s245
      %p254 = scmp.eq.s32.totalorder %s27, 1
      %p255 = por %p253, %p254
      %p256 = scmp.ne.s32.totalorder %s245, %s246
      %p257 = scmp.eq.s32.totalorder %s27, 0
      %p258 = por %p256, %p257
      %p259 = scmp.ne.s32.totalorder %s245, %s246
      %p260 = scmp.eq.s32.totalorder %s28, 1
      %p261 = por %p259, %p260
      %p263 = scmp.ne.s32.totalorder %s246, %s262
      %p264 = scmp.eq.s32.totalorder %s28, 0
      %p265 = por %p263, %p264
      %s266 = ssub.s32 %s30, %s37
      %p267 = scmp.eq.s32.totalorder %s266, 0
      %s269 = sadd.s32 %s268, 1
      %s270 = scalar_select %p267, %s268, %s269
      %p273 = pneg %p267
      %p274 = scmp.eq.s32.totalorder %s22, 1
      %p275 = por %p273, %p274
      %p276 = scmp.ne.s32.totalorder %s268, %s271
      %p277 = scmp.eq.s32.totalorder %s22, 0
      %p278 = por %p276, %p277
      %p279 = scmp.ne.s32.totalorder %s268, %s271
      %p280 = scmp.eq.s32.totalorder %s27, 1
      %p281 = por %p279, %p280
      %p282 = scmp.ne.s32.totalorder %s271, %s272
      %p283 = scmp.eq.s32.totalorder %s27, 0
      %p284 = por %p282, %p283
      %p285 = scmp.ne.s32.totalorder %s271, %s272
      %p286 = scmp.eq.s32.totalorder %s28, 1
      %p287 = por %p285, %p286
      %p289 = scmp.ne.s32.totalorder %s272, %s288
      %p290 = scmp.eq.s32.totalorder %s28, 0
      %p291 = por %p289, %p290
      %s292 = ssub.s32 %s30, %s37
      %p293 = scmp.eq.s32.totalorder %s292, 0
      %s295 = sadd.s32 %s294, 1
      %s296 = scalar_select %p293, %s294, %s295
      %p299 = pneg %p293
      %p300 = scmp.eq.s32.totalorder %s22, 1
      %p301 = por %p299, %p300
      %p302 = scmp.ne.s32.totalorder %s294, %s297
      %p303 = scmp.eq.s32.totalorder %s22, 0
      %p304 = por %p302, %p303
      %p305 = scmp.ne.s32.totalorder %s294, %s297
      %p306 = scmp.eq.s32.totalorder %s27, 1
      %p307 = por %p305, %p306
      %p308 = scmp.ne.s32.totalorder %s297, %s298
      %p309 = scmp.eq.s32.totalorder %s27, 0
      %p310 = por %p308, %p309
      %p311 = scmp.ne.s32.totalorder %s297, %s298
      %p312 = scmp.eq.s32.totalorder %s28, 1
      %p313 = por %p311, %p312
      %p315 = scmp.ne.s32.totalorder %s298, %s314
      %p316 = scmp.eq.s32.totalorder %s28, 0
      %p317 = por %p315, %p316
      %s318 = ssub.s32 %s30, %s37
      %p319 = scmp.eq.s32.totalorder %s318, 0
      %s321 = sadd.s32 %s320, 1
      %s322 = scalar_select %p319, %s320, %s321
      %p325 = pneg %p319
      %p326 = scmp.eq.s32.totalorder %s22, 1
      %p327 = por %p325, %p326
      %p328 = scmp.ne.s32.totalorder %s320, %s323
      %p329 = scmp.eq.s32.totalorder %s22, 0
      %p330 = por %p328, %p329
      %p331 = scmp.ne.s32.totalorder %s320, %s323
      %p332 = scmp.eq.s32.totalorder %s27, 1
      %p333 = por %p331, %p332
      %p334 = scmp.ne.s32.totalorder %s323, %s324
      %p335 = scmp.eq.s32.totalorder %s27, 0
      %p336 = por %p334, %p335
      %p337 = scmp.ne.s32.totalorder %s323, %s324
      %p338 = scmp.eq.s32.totalorder %s28, 1
      %p339 = por %p337, %p338
      %p341 = scmp.ne.s32.totalorder %s324, %s340
      %p342 = scmp.eq.s32.totalorder %s28, 0
      %p343 = por %p341, %p342
      %s344 = ssub.s32 %s30, %s37
      %p345 = scmp.eq.s32.totalorder %s344, 0
      %s347 = sadd.s32 %s346, 1
      %s348 = scalar_select %p345, %s346, %s347
      %p351 = pneg %p345
      %p352 = scmp.eq.s32.totalorder %s22, 1
      %p353 = por %p351, %p352
      %p354 = scmp.ne.s32.totalorder %s346, %s349
      %p355 = scmp.eq.s32.totalorder %s22, 0
      %p356 = por %p354, %p355
      %p357 = scmp.ne.s32.totalorder %s346, %s349
      %p358 = scmp.eq.s32.totalorder %s27, 1
      %p359 = por %p357, %p358
      %p360 = scmp.ne.s32.totalorder %s349, %s350
      %p361 = scmp.eq.s32.totalorder %s27, 0
      %p362 = por %p360, %p361
      %p363 = scmp.ne.s32.totalorder %s349, %s350
      %p364 = scmp.eq.s32.totalorder %s28, 1
      %p365 = por %p363, %p364
      %p367 = scmp.ne.s32.totalorder %s350, %s366
      %p368 = scmp.eq.s32.totalorder %s28, 0
      %p369 = por %p367, %p368
      %s370 = ssub.s32 %s30, %s37
      %p371 = scmp.eq.s32.totalorder %s370, 0
      %s373 = sadd.s32 %s372, 1
      %s374 = scalar_select %p371, %s372, %s373
      %p377 = pneg %p371
      %p378 = scmp.eq.s32.totalorder %s22, 1
      %p379 = por %p377, %p378
      %p380 = scmp.ne.s32.totalorder %s372, %s375
      %p381 = scmp.eq.s32.totalorder %s22, 0
      %p382 = por %p380, %p381
      %p383 = scmp.ne.s32.totalorder %s372, %s375
      %p384 = scmp.eq.s32.totalorder %s27, 1
      %p385 = por %p383, %p384
      %p386 = scmp.ne.s32.totalorder %s375, %s376
      %p387 = scmp.eq.s32.totalorder %s27, 0
      %p388 = por %p386, %p387
      %p389 = scmp.ne.s32.totalorder %s375, %s376
      %p390 = scmp.eq.s32.totalorder %s28, 1
      %p391 = por %p389, %p390
      %p393 = scmp.ne.s32.totalorder %s376, %s392
      %p394 = scmp.eq.s32.totalorder %s28, 0
      %p395 = por %p393, %p394
      %s396 = ssub.s32 %s30, %s37
      %p397 = scmp.eq.s32.totalorder %s396, 0
      %s399 = sadd.s32 %s398, 1
      %s400 = scalar_select %p397, %s398, %s399
      %p403 = pneg %p397
      %p404 = scmp.eq.s32.totalorder %s22, 1
      %p405 = por %p403, %p404
      %p406 = scmp.ne.s32.totalorder %s398, %s401
      %p407 = scmp.eq.s32.totalorder %s22, 0
      %p408 = por %p406, %p407
      %p409 = scmp.ne.s32.totalorder %s398, %s401
      %p410 = scmp.eq.s32.totalorder %s27, 1
      %p411 = por %p409, %p410
      %p412 = scmp.ne.s32.totalorder %s401, %s402
      %p413 = scmp.eq.s32.totalorder %s27, 0
      %p414 = por %p412, %p413
      %p415 = scmp.ne.s32.totalorder %s401, %s402
      %p416 = scmp.eq.s32.totalorder %s28, 1
      %p417 = por %p415, %p416
      %p419 = scmp.ne.s32.totalorder %s402, %s418
      %p420 = scmp.eq.s32.totalorder %s28, 0
      %p421 = por %p419, %p420
      %s422 = ssub.s32 %s29, %s41
      %p423 = scmp.eq.s32.totalorder %s422, 0
      %s425 = sadd.s32 %s424, 1
      %s426 = scalar_select %p423, %s424, %s425
      %p429 = pneg %p423
      %p430 = scmp.eq.s32.totalorder %s22, 1
      %p431 = por %p429, %p430
      %p432 = scmp.ne.s32.totalorder %s424, %s427
      %p433 = scmp.eq.s32.totalorder %s22, 0
      %p434 = por %p432, %p433
      %p435 = scmp.ne.s32.totalorder %s424, %s427
      %p436 = scmp.eq.s32.totalorder %s27, 1
      %p437 = por %p435, %p436
      %p438 = scmp.ne.s32.totalorder %s427, %s428
      %p439 = scmp.eq.s32.totalorder %s27, 0
      %p440 = por %p438, %p439
      %p441 = scmp.ne.s32.totalorder %s427, %s428
      %p442 = scmp.eq.s32.totalorder %s28, 1
      %p443 = por %p441, %p442
      %p445 = scmp.ne.s32.totalorder %s428, %s444
      %p446 = scmp.eq.s32.totalorder %s28, 0
      %p447 = por %p445, %p446
      %p448 = scmp.le.s32.totalorder 1, %s22
      %p449 = scmp.lt.s32.totalorder %s22, 3
      %p450 = pnand %p448, %p449
      %p451 = pneg %p450
      // Predicated region
      $region9: #{tpu_custom_call.1} parent=5 // pred_check
        _
      $region10: #{tpu_custom_call.1} parent=5 // pred_check_branch
        %453 = sbr.rel (%p450) target = $region12
      $region11: #{tpu_custom_call.1} parent=5 // pred_region
        %s454 = ssub.s32 %s22, 1
        // Predicated region
        $region13: #{tpu_custom_call.1} parent=11 // pred_check
          %p455 = pneg %p60
        $region14: #{tpu_custom_call.1} parent=11 // pred_check_branch
          %457 = sbr.rel (%p455) target = $region16
        $region15: #{tpu_custom_call.1} parent=11 // pred_region
          %s458 = smul.u32 2, %s31
          %p459 = scmp.lt.s32.totalorder %s458, 1
          %s460 = scalar_select %p459, %s458, 1
          %s461 = smul.addr %s460, 4
          %s462 = smul.addr %s461, 4
          %s463 = scalar_lea.vmem %s0, %s462
          %s464 = smul.u32 2, %s31
        $region16: #{tpu_custom_call.1} parent=11 // pred_fallthru
          _
        // Predicated region
        $region17: #{tpu_custom_call.1} parent=11 // pred_check
          %p465 = pneg %p81
        $region18: #{tpu_custom_call.1} parent=11 // pred_check_branch
          %467 = sbr.rel (%p465) target = $region20
        $region19: #{tpu_custom_call.1} parent=11 // pred_region
          _
        $region20: #{tpu_custom_call.1} parent=11 // pred_fallthru
          _
        // Predicated region
        $region21: #{tpu_custom_call.1} parent=11 // pred_check
          %p468 = pneg %p102
        $region22: #{tpu_custom_call.1} parent=11 // pred_check_branch
          %470 = sbr.rel (%p468) target = $region24
        $region23: #{tpu_custom_call.1} parent=11 // pred_region
          _
        $region24: #{tpu_custom_call.1} parent=11 // pred_fallthru
          _
      $region12: #{tpu_custom_call.1} parent=5 // pred_fallthru
        _
      %p471 = scmp.lt.s32.totalorder %s22, 2
      // Predicated region
      $region25: #{tpu_custom_call.1} parent=5 // pred_check
        %p472 = pneg %p471
      $region26: #{tpu_custom_call.1} parent=5 // pred_check_branch
        %474 = sbr.rel (%p472) target = $region28
      $region27: #{tpu_custom_call.1} parent=5 // pred_region
        // Predicated region
        $region29: #{tpu_custom_call.1} parent=27 // pred_check
          %p475 = pneg %p122
        $region30: #{tpu_custom_call.1} parent=27 // pred_check_branch
          %477 = sbr.rel (%p475) target = $region32
        $region31: #{tpu_custom_call.1} parent=27 // pred_region
          %p478 = scmp.lt.s32.totalorder %s30, 1
          %s479 = scalar_select %p478, %s30, 1
          %s480 = scalar_lea.vmem %s3, %s479
        $region32: #{tpu_custom_call.1} parent=27 // pred_fallthru
          _
        // Predicated region
        $region33: #{tpu_custom_call.1} parent=27 // pred_check
          %p481 = pneg %p148
        $region34: #{tpu_custom_call.1} parent=27 // pred_check_branch
          %483 = sbr.rel (%p481) target = $region36
        $region35: #{tpu_custom_call.1} parent=27 // pred_region
          %p484 = scmp.lt.s32.totalorder %s30, 1
          %s485 = scalar_select %p484, %s30, 1
          %s486 = scalar_lea.vmem %s4, %s485
        $region36: #{tpu_custom_call.1} parent=27 // pred_fallthru
          _
        // Predicated region
        $region37: #{tpu_custom_call.1} parent=27 // pred_check
          %p487 = pneg %p174
        $region38: #{tpu_custom_call.1} parent=27 // pred_check_branch
          %489 = sbr.rel (%p487) target = $region40
        $region39: #{tpu_custom_call.1} parent=27 // pred_region
          %p490 = scmp.lt.s32.totalorder %s30, 1
          %s491 = scalar_select %p490, %s30, 1
          %s492 = smul.addr %s491, 4
          %s493 = smul.addr %s492, 4
          %s494 = scalar_lea.vmem %s5, %s493
        $region40: #{tpu_custom_call.1} parent=27 // pred_fallthru
          _
        // Predicated region
        $region41: #{tpu_custom_call.1} parent=27 // pred_check
          %p495 = pneg %p200
        $region42: #{tpu_custom_call.1} parent=27 // pred_check_branch
          %497 = sbr.rel (%p495) target = $region44
        $region43: #{tpu_custom_call.1} parent=27 // pred_region
          %p498 = scmp.lt.s32.totalorder %s30, 1
          %s499 = scalar_select %p498, %s30, 1
          %s500 = scalar_lea.vmem %s6, %s499
        $region44: #{tpu_custom_call.1} parent=27 // pred_fallthru
          _
        // Predicated region
        $region45: #{tpu_custom_call.1} parent=27 // pred_check
          %p501 = pneg %p226
        $region46: #{tpu_custom_call.1} parent=27 // pred_check_branch
          %503 = sbr.rel (%p501) target = $region48
        $region47: #{tpu_custom_call.1} parent=27 // pred_region
          %p504 = scmp.lt.s32.totalorder %s30, 1
          %s505 = scalar_select %p504, %s30, 1
          %s506 = smul.addr %s505, 4
          %s507 = smul.addr %s506, 4
          %s508 = scalar_lea.vmem %s7, %s507
        $region48: #{tpu_custom_call.1} parent=27 // pred_fallthru
          _
        // Predicated region
        $region49: #{tpu_custom_call.1} parent=27 // pred_check
          %p509 = pneg %p252
        $region50: #{tpu_custom_call.1} parent=27 // pred_check_branch
          %511 = sbr.rel (%p509) target = $region52
        $region51: #{tpu_custom_call.1} parent=27 // pred_region
          %p512 = scmp.lt.s32.totalorder %s30, 1
          %s513 = scalar_select %p512, %s30, 1
          %s514 = scalar_lea.vmem %s8, %s513
        $region52: #{tpu_custom_call.1} parent=27 // pred_fallthru
          _
        // Predicated region
        $region53: #{tpu_custom_call.1} parent=27 // pred_check
          %p515 = pneg %p278
        $region54: #{tpu_custom_call.1} parent=27 // pred_check_branch
          %517 = sbr.rel (%p515) target = $region56
        $region55: #{tpu_custom_call.1} parent=27 // pred_region
          %p518 = scmp.lt.s32.totalorder %s30, 1
          %s519 = scalar_select %p518, %s30, 1
          %s520 = scalar_lea.vmem %s9, %s519
        $region56: #{tpu_custom_call.1} parent=27 // pred_fallthru
          _
        // Predicated region
        $region57: #{tpu_custom_call.1} parent=27 // pred_check
          %p521 = pneg %p304
        $region58: #{tpu_custom_call.1} parent=27 // pred_check_branch
          %523 = sbr.rel (%p521) target = $region60
        $region59: #{tpu_custom_call.1} parent=27 // pred_region
          %p524 = scmp.lt.s32.totalorder %s30, 1
          %s525 = scalar_select %p524, %s30, 1
          %s526 = scalar_lea.vmem %s10, %s525
        $region60: #{tpu_custom_call.1} parent=27 // pred_fallthru
          _
        // Predicated region
        $region61: #{tpu_custom_call.1} parent=27 // pred_check
          %p527 = pneg %p330
        $region62: #{tpu_custom_call.1} parent=27 // pred_check_branch
          %529 = sbr.rel (%p527) target = $region64
        $region63: #{tpu_custom_call.1} parent=27 // pred_region
          %p530 = scmp.lt.s32.totalorder %s30, 1
          %s531 = scalar_select %p530, %s30, 1
          %s532 = smul.addr %s531, 4
          %s533 = smul.addr %s532, 4
          %s534 = scalar_lea.vmem %s11, %s533
        $region64: #{tpu_custom_call.1} parent=27 // pred_fallthru
          _
        // Predicated region
        $region65: #{tpu_custom_call.1} parent=27 // pred_check
          %p535 = pneg %p356
        $region66: #{tpu_custom_call.1} parent=27 // pred_check_branch
          %537 = sbr.rel (%p535) target = $region68
        $region67: #{tpu_custom_call.1} parent=27 // pred_region
          %p538 = scmp.lt.s32.totalorder %s30, 1
          %s539 = scalar_select %p538, %s30, 1
          %s540 = scalar_lea.vmem %s12, %s539
        $region68: #{tpu_custom_call.1} parent=27 // pred_fallthru
          _
        // Predicated region
        $region69: #{tpu_custom_call.1} parent=27 // pred_check
          %p541 = pneg %p382
        $region70: #{tpu_custom_call.1} parent=27 // pred_check_branch
          %543 = sbr.rel (%p541) target = $region72
        $region71: #{tpu_custom_call.1} parent=27 // pred_region
          %p544 = scmp.lt.s32.totalorder %s30, 1
          %s545 = scalar_select %p544, %s30, 1
          %s546 = smul.addr %s545, 16
          %s547 = smul.addr %s546, 4
          %s548 = scalar_lea.vmem %s13, %s547
        $region72: #{tpu_custom_call.1} parent=27 // pred_fallthru
          _
        // Predicated region
        $region73: #{tpu_custom_call.1} parent=27 // pred_check
          %p549 = pneg %p408
        $region74: #{tpu_custom_call.1} parent=27 // pred_check_branch
          %551 = sbr.rel (%p549) target = $region76
        $region75: #{tpu_custom_call.1} parent=27 // pred_region
          %p552 = scmp.lt.s32.totalorder %s30, 1
          %s553 = scalar_select %p552, %s30, 1
          %s554 = scalar_lea.vmem %s14, %s553
        $region76: #{tpu_custom_call.1} parent=27 // pred_fallthru
          _
      $region28: #{tpu_custom_call.1} parent=5 // pred_fallthru
        _
      %p555 = scmp.le.s32.totalorder 1, %s22
      %p556 = scmp.lt.s32.totalorder %s22, 3
      %p557 = pnand %p555, %p556
      %p558 = pneg %p557
      // Predicated region
      $region77: #{tpu_custom_call.1} parent=5 // pred_check
        _
      $region78: #{tpu_custom_call.1} parent=5 // pred_check_branch
        %560 = sbr.rel (%p557) target = $region80
      $region79: #{tpu_custom_call.1} parent=5 // pred_region
        %s561 = ssub.s32 %s22, 1
        %s562 = smul.u32 2, %s31
        %p563 = scmp.lt.s32.totalorder %s562, 1
        %s564 = scalar_select %p563, %s562, 1
        %s565 = smul.addr %s564, 4
        %s566 = smul.addr %s565, 4
        %s567 = scalar_lea.vmem %s0, %s566
        %p568 = pneg %p60
        %p569 = pneg %p57
        %p570 = pneg %p81
        %p571 = pneg %p78
        %p572 = pneg %p102
        %p573 = pneg %p99
        %p574 = scmp.lt.s32.totalorder %s32, 1
        %s575 = scalar_select %p574, %s32, 1
        %s576 = scalar_lea.vmem %s3, %s575
        %p577 = pneg %p128
        %p578 = pneg %p125
        %p579 = scmp.lt.s32.totalorder %s32, 1
        %s580 = scalar_select %p579, %s32, 1
        %s581 = scalar_lea.vmem %s4, %s580
        %p582 = pneg %p154
        %p583 = pneg %p151
        %p584 = scmp.lt.s32.totalorder %s32, 1
        %s585 = scalar_select %p584, %s32, 1
        %s586 = smul.addr %s585, 4
        %s587 = smul.addr %s586, 4
        %s588 = scalar_lea.vmem %s5, %s587
        %p589 = pneg %p180
        %p590 = pneg %p177
        %p591 = scmp.lt.s32.totalorder %s32, 1
        %s592 = scalar_select %p591, %s32, 1
        %s593 = scalar_lea.vmem %s6, %s592
        %p594 = pneg %p206
        %p595 = pneg %p203
        %p596 = scmp.lt.s32.totalorder %s32, 1
        %s597 = scalar_select %p596, %s32, 1
        %s598 = smul.addr %s597, 4
        %s599 = smul.addr %s598, 4
        %s600 = scalar_lea.vmem %s7, %s599
        %p601 = pneg %p232
        %p602 = pneg %p229
        %p603 = scmp.lt.s32.totalorder %s32, 1
        %s604 = scalar_select %p603, %s32, 1
        %s605 = scalar_lea.vmem %s8, %s604
        %p606 = pneg %p258
        %p607 = pneg %p255
        %p608 = scmp.lt.s32.totalorder %s32, 1
        %s609 = scalar_select %p608, %s32, 1
        %s610 = scalar_lea.vmem %s9, %s609
        %p611 = pneg %p284
        %p612 = pneg %p281
        %p613 = scmp.lt.s32.totalorder %s32, 1
        %s614 = scalar_select %p613, %s32, 1
        %s615 = scalar_lea.vmem %s10, %s614
        %p616 = pneg %p310
        %p617 = pneg %p307
        %p618 = scmp.lt.s32.totalorder %s32, 1
        %s619 = scalar_select %p618, %s32, 1
        %s620 = smul.addr %s619, 4
        %s621 = smul.addr %s620, 4
        %s622 = scalar_lea.vmem %s11, %s621
        %p623 = pneg %p336
        %p624 = pneg %p333
        %p625 = scmp.lt.s32.totalorder %s32, 1
        %s626 = scalar_select %p625, %s32, 1
        %s627 = scalar_lea.vmem %s12, %s626
        %p628 = pneg %p362
        %p629 = pneg %p359
        %p630 = scmp.lt.s32.totalorder %s32, 1
        %s631 = scalar_select %p630, %s32, 1
        %s632 = smul.addr %s631, 16
        %s633 = smul.addr %s632, 4
        %s634 = scalar_lea.vmem %s13, %s633
        %p635 = pneg %p388
        %p636 = pneg %p385
        %p637 = scmp.lt.s32.totalorder %s32, 1
        %s638 = scalar_select %p637, %s32, 1
        %s639 = scalar_lea.vmem %s14, %s638
        %p640 = pneg %p414
        %p641 = pneg %p411
        %p642 = pneg %p440
        %p643 = pneg %p437
        %s644 = smul.u32 2, %s31
        %p645 = scmp.lt.s32.totalorder %s644, 1
        %s646 = scalar_select %p645, %s644, 1
        %s647 = smul.addr %s646, 4
        %s648 = smul.addr %s647, 4
        %s649 = scalar_lea.vmem %s0, %s648
        %s650 = smul.u32 2, %s31
        %p651 = scmp.lt.s32.totalorder %s32, 1
        %s652 = scalar_select %p651, %s32, 1
        %s653 = scalar_lea.vmem %s3, %s652
        %p654 = scmp.lt.s32.totalorder %s32, 1
        %s655 = scalar_select %p654, %s32, 1
        %s656 = scalar_lea.vmem %s4, %s655
        %p657 = scmp.lt.s32.totalorder %s32, 1
        %s658 = scalar_select %p657, %s32, 1
        %s659 = smul.addr %s658, 4
        %s660 = smul.addr %s659, 4
        %s661 = scalar_lea.vmem %s5, %s660
        %p662 = scmp.lt.s32.totalorder %s32, 1
        %s663 = scalar_select %p662, %s32, 1
        %s664 = scalar_lea.vmem %s6, %s663
        %p665 = scmp.lt.s32.totalorder %s32, 1
        %s666 = scalar_select %p665, %s32, 1
        %s667 = smul.addr %s666, 4
        %s668 = smul.addr %s667, 4
        %s669 = scalar_lea.vmem %s7, %s668
        %p670 = scmp.lt.s32.totalorder %s32, 1
        %s671 = scalar_select %p670, %s32, 1
        %s672 = scalar_lea.vmem %s8, %s671
        %p673 = scmp.lt.s32.totalorder %s32, 1
        %s674 = scalar_select %p673, %s32, 1
        %s675 = scalar_lea.vmem %s9, %s674
        %p676 = scmp.lt.s32.totalorder %s32, 1
        %s677 = scalar_select %p676, %s32, 1
        %s678 = scalar_lea.vmem %s10, %s677
        %p679 = scmp.lt.s32.totalorder %s32, 1
        %s680 = scalar_select %p679, %s32, 1
        %s681 = smul.addr %s680, 4
        %s682 = smul.addr %s681, 4
        %s683 = scalar_lea.vmem %s11, %s682
        %p684 = scmp.lt.s32.totalorder %s32, 1
        %s685 = scalar_select %p684, %s32, 1
        %s686 = scalar_lea.vmem %s12, %s685
        %p687 = scmp.lt.s32.totalorder %s32, 1
        %s688 = scalar_select %p687, %s32, 1
        %s689 = smul.addr %s688, 16
        %s690 = smul.addr %s689, 4
        %s691 = scalar_lea.vmem %s13, %s690
        %p692 = scmp.lt.s32.totalorder %s32, 1
        %s693 = scalar_select %p692, %s32, 1
        %s694 = scalar_lea.vmem %s14, %s693
        %s695 = smul.u32 2, %s31
        %p697 = scmp.eq.s32.totalorder %s32, 0
        // Predicated region
        $region81: #{tpu_custom_call.1} parent=79 // pred_check
          %p698 = pneg %p697
        $region82: #{tpu_custom_call.1} parent=79 // pred_check_branch
          %700 = sbr.rel (%p698) target = $region84
        $region83: #{tpu_custom_call.1} parent=79 // pred_region
          %v701 = vld [vmem:[%s649] sm:$0xff]
          %v702 = vld [vmem:[%s649 + $0x8] sm:$0xff]
          %v703 = vld [vmem:[%s649 + $0x10] sm:$0xff]
          %v704 = vld [vmem:[%s649 + $0x18] sm:$0xff]
          %v705 = vld [vmem:[%s1] sm:$0xf]
          %v706 = vld [vmem:[%s1 + $0x4] sm:$0xf]
          %v707 = vld [vmem:[%s1 + $0x8] sm:$0xf]
          %v708 = vld [vmem:[%s1 + $0xc] sm:$0xf]
          %v709 = vld [vmem:[%s1 + $0x10] sm:$0xf]
          %v710 = vld [vmem:[%s1 + $0x14] sm:$0xf]
          %v711 = vld [vmem:[%s1 + $0x18] sm:$0xf]
          %v712 = vld [vmem:[%s1 + $0x1c] sm:$0xf]
          %v713 = vld [vmem:[%s1 + $0x20] sm:$0xf]
          %v714 = vld [vmem:[%s1 + $0x24] sm:$0xf]
          %v715 = vld [vmem:[%s1 + $0x28] sm:$0xf]
          %v716 = vld [vmem:[%s1 + $0x2c] sm:$0xf]
          %v717 = vld [vmem:[%s1 + $0x30] sm:$0xf]
          %v718 = vld [vmem:[%s1 + $0x34] sm:$0xf]
          %v719 = vld [vmem:[%s1 + $0x38] sm:$0xf]
          %v720 = vld [vmem:[%s1 + $0x3c] sm:$0xf]
          %v721 = vld [vmem:[%s1 + $0x40] sm:$0xf]
          %v722 = vld [vmem:[%s1 + $0x44] sm:$0xf]
          %v723 = vld [vmem:[%s1 + $0x48] sm:$0xf]
          %v724 = vld [vmem:[%s1 + $0x4c] sm:$0xf]
          %v725 = vld [vmem:[%s1 + $0x50] sm:$0xf]
          %v726 = vld [vmem:[%s1 + $0x54] sm:$0xf]
          %v727 = vld [vmem:[%s1 + $0x58] sm:$0xf]
          %v728 = vld [vmem:[%s1 + $0x5c] sm:$0xf]
          %v729 = vld [vmem:[%s1 + $0x60] sm:$0xf]
          %v730 = vld [vmem:[%s1 + $0x64] sm:$0xf]
          %v731 = vld [vmem:[%s1 + $0x68] sm:$0xf]
          %v732 = vld [vmem:[%s1 + $0x6c] sm:$0xf]
          %v733 = vld [vmem:[%s1 + $0x70] sm:$0xf]
          %v734 = vld [vmem:[%s1 + $0x74] sm:$0xf]
          %v735 = vld [vmem:[%s1 + $0x78] sm:$0xf]
          %v736 = vld [vmem:[%s1 + $0x7c] sm:$0xf]
          %v741 = vunpack.c.l.b16 %v701
          %v742 = vunpack.c.h.b16 %v701
          %v743 = vunpack.c.l.b16 %v702
          %v744 = vunpack.c.h.b16 %v702
          %v745 = vunpack.c.l.b16 %v703
          %v746 = vunpack.c.h.b16 %v703
          %v747 = vunpack.c.l.b16 %v704
          %v748 = vunpack.c.h.b16 %v704
          %v749 = vpack.c.b16 %v743, %v741
          %v750 = vpack.c.b16 %v744, %v742
          %v751 = vpack.c.b16 %v747, %v745
          %v752 = vpack.c.b16 %v748, %v746
          %v789 = vunpack.c.l.b16 %v705
          %v790 = vunpack.c.l.b16 %v706
          %v791 = vunpack.c.l.b16 %v707
          %v792 = vunpack.c.l.b16 %v708
          %v793 = vunpack.c.l.b16 %v709
          %v794 = vunpack.c.l.b16 %v710
          %v795 = vunpack.c.l.b16 %v711
          %v796 = vunpack.c.l.b16 %v712
          %v797 = vunpack.c.l.b16 %v713
          %v798 = vunpack.c.l.b16 %v714
          %v799 = vunpack.c.l.b16 %v715
          %v800 = vunpack.c.l.b16 %v716
          %v801 = vunpack.c.l.b16 %v717
          %v802 = vunpack.c.l.b16 %v718
          %v803 = vunpack.c.l.b16 %v719
          %v804 = vunpack.c.l.b16 %v720
          %v805 = vunpack.c.l.b16 %v721
          %v806 = vunpack.c.l.b16 %v722
          %v807 = vunpack.c.l.b16 %v723
          %v808 = vunpack.c.l.b16 %v724
          %v809 = vunpack.c.l.b16 %v725
          %v810 = vunpack.c.l.b16 %v726
          %v811 = vunpack.c.l.b16 %v727
          %v812 = vunpack.c.l.b16 %v728
          %v813 = vunpack.c.l.b16 %v729
          %v814 = vunpack.c.l.b16 %v730
          %v815 = vunpack.c.l.b16 %v731
          %v816 = vunpack.c.l.b16 %v732
          %v817 = vunpack.c.l.b16 %v733
          %v818 = vunpack.c.l.b16 %v734
          %v819 = vunpack.c.l.b16 %v735
          %v820 = vunpack.c.l.b16 %v736
          %v821 = vpack.c.b16 %v790, %v789
          %v822 = vpack.c.b16 %v792, %v791
          %v823 = vpack.c.b16 %v794, %v793
          %v824 = vpack.c.b16 %v796, %v795
          %v825 = vpack.c.b16 %v798, %v797
          %v826 = vpack.c.b16 %v800, %v799
          %v827 = vpack.c.b16 %v802, %v801
          %v828 = vpack.c.b16 %v804, %v803
          %v829 = vpack.c.b16 %v806, %v805
          %v830 = vpack.c.b16 %v808, %v807
          %v831 = vpack.c.b16 %v810, %v809
          %v832 = vpack.c.b16 %v812, %v811
          %v833 = vpack.c.b16 %v814, %v813
          %v834 = vpack.c.b16 %v816, %v815
          %v835 = vpack.c.b16 %v818, %v817
          %v836 = vpack.c.b16 %v820, %v819
          %853 = vmatprep.subr.bf16.mxu0 0
          %854 = vmatpush1.bf16.msra.mxu0 %v821
          %855 = vmatprep.subr.bf16.mxu0 0
          %856 = vmatpush1.bf16.msra.mxu0 %v822
          %857 = vmatprep.subr.bf16.mxu0 0
          %858 = vmatpush1.bf16.msra.mxu0 %v823
          %859 = vmatprep.subr.bf16.mxu0 0
          %860 = vmatpush1.bf16.msra.mxu0 %v824
          %861 = vmatprep.subr.bf16.mxu0 0
          %862 = vmatpush1.bf16.msra.mxu0 %v825
          %863 = vmatprep.subr.bf16.mxu0 0
          %864 = vmatpush1.bf16.msra.mxu0 %v826
          %865 = vmatprep.subr.bf16.mxu0 0
          %866 = vmatpush1.bf16.msra.mxu0 %v827
          %867 = vmatprep.subr.bf16.mxu0 0
          %868 = vmatpush1.bf16.msra.mxu0 %v828
          %869 = vmatprep.subr.bf16.mxu0 0
          %870 = vmatpush1.bf16.msra.mxu0 %v829
          %871 = vmatprep.subr.bf16.mxu0 0
          %872 = vmatpush1.bf16.msra.mxu0 %v830
          %873 = vmatprep.subr.bf16.mxu0 0
          %874 = vmatpush1.bf16.msra.mxu0 %v831
          %875 = vmatprep.subr.bf16.mxu0 0
          %876 = vmatpush1.bf16.msra.mxu0 %v832
          %877 = vmatprep.subr.bf16.mxu0 0
          %878 = vmatpush1.bf16.msra.mxu0 %v833
          %879 = vmatprep.subr.bf16.mxu0 0
          %880 = vmatpush1.bf16.msra.mxu0 %v834
          %881 = vmatprep.subr.bf16.mxu0 0
          %882 = vmatpush1.bf16.msra.mxu0 %v835
          %883 = vmatprep.subr.bf16.mxu0 0
          %884 = vmatpush1.bf16.msra.mxu0 %v836
          %885 = vmatprep.mubr.bf16.mxu0 %v750
          %886 = vmatmul.mubr.bf16.gmra.mrb[0].mxu0 %v749
          %v887 = vpop.f32.mrb[0].mxu0
          %v888 = vadd.f32 0.0, %v887
          %v889 = vpop.f32.mrb[0].mxu0
          %v890 = vpop.f32.mrb[0].mxu0
          %v891 = vadd.f32 0.0, %v890
          %v892 = vpop.f32.mrb[0].mxu0
          %893 = vmatprep.mubr.bf16.mxu0 %v752
          %894 = vmatmul.mubr.bf16.gmra.mrb[0].mxu0 %v751
          %v895 = vpop.f32.mrb[0].mxu0
          %v896 = vadd.f32 0.0, %v895
          %v897 = vpop.f32.mrb[0].mxu0
          %v898 = vpop.f32.mrb[0].mxu0
          %v899 = vadd.f32 0.0, %v898
          %v900 = vpop.f32.mrb[0].mxu0
          %901 = vdwg.mxu0
          %v902 = vld [vmem:[%s2] sm:$0xff]
          %v903 = vld [vmem:[%s2 + $0x8] sm:$0xff]
          %v904 = vadd.f32 %v888, %v902
          %v905 = vadd.f32 %v891, %v903
          %v906 = vadd.f32 %v896, %v902
          %v907 = vadd.f32 %v899, %v903
          %vm908 = vcmask 261120
          %909 = vst.msk [vmem:[#allocation2] sm:$0xff] %vm908, %v904
          %910 = vst.msk [vmem:[#allocation2 + $0x8] sm:$0xff] %vm908, %v905
          %911 = vst.msk [vmem:[#allocation2 + $0x10] sm:$0xff] %vm908, %v906
          %912 = vst.msk [vmem:[#allocation2 + $0x18] sm:$0xff] %vm908, %v907
        $region84: #{tpu_custom_call.1} parent=79 // pred_fallthru
          _
        %v913 = vld [vmem:[#allocation2] sm:$0xff]
        %v914 = vld [vmem:[#allocation2 + $0x8] sm:$0xff]
        %v915 = vld [vmem:[#allocation2 + $0x10] sm:$0xff]
        %v916 = vld [vmem:[#allocation2 + $0x18] sm:$0xff]
        %v917 = vld [vmem:[%s653] sm:$0x1]
        %v918 = vld [vmem:[%s656] sm:$0x1]
        %vm919 = vcmask 261120
        %v920 = vsel %vm919, %v913, 0.0
        %921 = vadd.xlane.f32.xlu0 %v920
        %v922 = vpop.xlane.xlu0 %921
        %v923 = vsel %vm919, %v914, 0.0
        %924 = vadd.xlane.f32.xlu0 %v923
        %v925 = vpop.xlane.xlu0 %924
        %v926 = vsel %vm919, %v915, 0.0
        %927 = vadd.xlane.f32.xlu0 %v926
        %v928 = vpop.xlane.xlu0 %927
        %v929 = vsel %vm919, %v916, 0.0
        %930 = vadd.xlane.f32.xlu0 %v929
        %v931 = vpop.xlane.xlu0 %930
        %v932 = vrcp.pop 32.0
        %v933 = vmul.f32 %v922, %v932
        %v934 = vmul.f32 %v925, %v932
        %v935 = vmul.f32 %v928, %v932
        %v936 = vmul.f32 %v931, %v932
        %v937 = vsub.f32 %v913, %v933
        %v938 = vsub.f32 %v914, %v934
        %v939 = vsub.f32 %v915, %v935
        %v940 = vsub.f32 %v916, %v936
        %v941 = vmul.f32 %v937, %v937
        %v942 = vmul.f32 %v938, %v938
        %v943 = vmul.f32 %v939, %v939
        %v944 = vmul.f32 %v940, %v940
        %v945 = vsel %vm919, %v941, 0.0
        %946 = vadd.xlane.f32.xlu0 %v945
        %v947 = vpop.xlane.xlu0 %946
        %v948 = vsel %vm919, %v942, 0.0
        %949 = vadd.xlane.f32.xlu0 %v948
        %v950 = vpop.xlane.xlu0 %949
        %v951 = vsel %vm919, %v943, 0.0
        %952 = vadd.xlane.f32.xlu0 %v951
        %v953 = vpop.xlane.xlu0 %952
        %v954 = vsel %vm919, %v944, 0.0
        %955 = vadd.xlane.f32.xlu0 %v954
        %v956 = vpop.xlane.xlu0 %955
        %v957 = vmul.f32 %v947, %v932
        %v958 = vmul.f32 %v950, %v932
        %v959 = vmul.f32 %v953, %v932
        %v960 = vmul.f32 %v956, %v932
        %v961 = vadd.f32 %v957, 1e-06
        %v962 = vadd.f32 %v958, 1e-06
        %v963 = vadd.f32 %v959, 1e-06
        %v964 = vadd.f32 %v960, 1e-06
        %v965 = vrsqrt.pop %v961
        %v966 = vrsqrt.pop %v962
        %v967 = vrsqrt.pop %v963
        %v968 = vrsqrt.pop %v964
        %v969 = vmul.f32 %v937, %v965
        %v970 = vmul.f32 %v938, %v966
        %v971 = vmul.f32 %v939, %v967
        %v972 = vmul.f32 %v940, %v968
        %v974 = vlaneseq
        %v975 = vshrl.u32 %v974, 7
        %v976 = vsub.s32 0, %v975
        %v977 = vrot.slane %v917, %v976
        %v979 = vmul.f32 %v969, %v977
        %v980 = vmul.f32 %v970, %v977
        %v981 = vmul.f32 %v971, %v977
        %v982 = vmul.f32 %v972, %v977
        %v984 = vlaneseq
        %v985 = vshrl.u32 %v984, 7
        %v986 = vsub.s32 0, %v985
        %v987 = vrot.slane %v918, %v986
        %v989 = vadd.f32 %v979, %v987
        %v990 = vadd.f32 %v980, %v987
        %v991 = vadd.f32 %v981, %v987
        %v992 = vadd.f32 %v982, %v987
        %v993 = vpack.c.bf16 %v990, %v989
        %v994 = vpack.c.bf16 %v992, %v991
        %v995 = vld [vmem:[%s661] sm:$0xf]
        %v996 = vld [vmem:[%s661 + $0x4] sm:$0xf]
        %v997 = vld [vmem:[%s661 + $0x8] sm:$0xf]
        %v998 = vld [vmem:[%s661 + $0xc] sm:$0xf]
        %v999 = vld [vmem:[%s664] sm:$0x1]
        %v1001 = vlaneseq
        %v1002 = vshrl.u32 %v1001, 7
        %v1003 = vsub.s32 0, %v1002
        %v1004 = vrot.slane %v999, %v1003
        %v1010 = vunpack.c.l.b16 %v995
        %v1011 = vunpack.c.l.b16 %v996
        %v1012 = vunpack.c.l.b16 %v997
        %v1013 = vunpack.c.l.b16 %v998
        %v1014 = vpack.c.b16 %v1011, %v1010
        %v1015 = vpack.c.b16 %v1013, %v1012
        %v1019 = vsel %vm919, %v993, 0
        %v1022 = vsel %vm919, %v994, 0
        %1024 = vmatprep.subr.bf16.mxu0 0
        %1025 = vmatpush1.bf16.msra.mxu0 %v1014
        %1026 = vmatprep.subr.bf16.mxu0 0
        %1027 = vmatpush1.bf16.msra.mxu0 %v1015
        %1028 = vmatprep.subr.bf16.mxu0 0
        %1029 = vmatpush1.bf16.msra.mxu0 0
        %1030 = vmatprep.subr.bf16.mxu0 0
        %1031 = vmatpush1.bf16.msra.mxu0 0
        %1032 = vmatprep.subr.bf16.mxu0 0
        %1033 = vmatpush1.bf16.msra.mxu0 0
        %1034 = vmatprep.subr.bf16.mxu0 0
        %1035 = vmatpush1.bf16.msra.mxu0 0
        %1036 = vmatprep.subr.bf16.mxu0 0
        %1037 = vmatpush1.bf16.msra.mxu0 0
        %1038 = vmatprep.subr.bf16.mxu0 0
        %1039 = vmatpush1.bf16.msra.mxu0 0
        %1040 = vmatprep.subr.bf16.mxu0 0
        %1041 = vmatpush1.bf16.msra.mxu0 0
        %1042 = vmatprep.subr.bf16.mxu0 0
        %1043 = vmatpush1.bf16.msra.mxu0 0
        %1044 = vmatprep.subr.bf16.mxu0 0
        %1045 = vmatpush1.bf16.msra.mxu0 0
        %1046 = vmatprep.subr.bf16.mxu0 0
        %1047 = vmatpush1.bf16.msra.mxu0 0
        %1048 = vmatprep.subr.bf16.mxu0 0
        %1049 = vmatpush1.bf16.msra.mxu0 0
        %1050 = vmatprep.subr.bf16.mxu0 0
        %1051 = vmatpush1.bf16.msra.mxu0 0
        %1052 = vmatprep.subr.bf16.mxu0 0
        %1053 = vmatpush1.bf16.msra.mxu0 0
        %1054 = vmatprep.subr.bf16.mxu0 0
        %1055 = vmatpush1.bf16.msra.mxu0 0
        %1056 = vmatprep.mubr.bf16.mxu0 0
        %1057 = vmatmul.mubr.bf16.gmra.mrb[0].mxu0 %v1019
        %v1058 = vpop.f32.mrb[0].mxu0
        %v1059 = vadd.f32 %v1004, %v1058
        %v1060 = vpop.f32.mrb[0].mxu0
        %v1061 = vpop.f32.mrb[0].mxu0
        %v1062 = vadd.f32 %v1004, %v1061
        %v1063 = vpop.f32.mrb[0].mxu0
        %1064 = vmatprep.mubr.bf16.mxu0 0
        %1065 = vmatmul.mubr.bf16.gmra.mrb[0].mxu0 %v1022
        %v1066 = vpop.f32.mrb[0].mxu0
        %v1067 = vadd.f32 %v1004, %v1066
        %v1068 = vpop.f32.mrb[0].mxu0
        %v1069 = vpop.f32.mrb[0].mxu0
        %v1070 = vadd.f32 %v1004, %v1069
        %v1071 = vpop.f32.mrb[0].mxu0
        %1072 = vdwg.mxu0
        %v1073 = vpack.c.bf16 %v1062, %v1059
        %v1074 = vpack.c.bf16 %v1070, %v1067
        %vm1075 = vcmask 785408
        %1076 = vst.msk [vmem:[#allocation3] sm:$0xff] %vm1075, %v1073
        %1077 = vst.msk [vmem:[#allocation3 + $0x8] sm:$0xff] %vm1075, %v1074
        %v1078 = vlaneseq
        %v1079 = vand.u32 %v1078, 127
        %vm1080 = vcmp.lt.s32.totalorder %v1079, 5
        %v1081 = vsel %vm1080, 0.0, -1e+30
        loop: start=0, step=1, limit=2
        $region85: #{tpu_custom_call.1} parent=79 // loop_pre_header
          _
        $region86: #{tpu_custom_call.1} parent=79 // loop_header
          %s1083 = sphi 0, %s1087
          %p1084 = scmp.ge.s32.totalorder %s1083, 2
        $region87: #{tpu_custom_call.1} parent=79 // loop_header_branch
          %1086 = sbr.rel (%p1084) target = $region91
        $region88: #{tpu_custom_call.1} parent=79 // loop_body
          %s1088 = smul.u32 %s1083, 16
          %s1089 = sshra.s32 %s1088, 4
          %s1090 = sand.u32 %s1088, 15
          %s1091 = smul.addr %s1089, 8
          %s1092 = scalar_lea.vmem [#allocation3], %s1091
          %v1093 = vld [vmem:[%s1092] sm:$0xff]
          %1095 = vrot.lane.b32.xlu0 %v1093, 96
          %v1096 = vpop.permute.xlu0 %1095
          %vm1097 = vcmask 64512
          %v1099 = vsel %vm1097, %v1093, 0
          %v1102 = vsel %vm1097, %v1096, 0
          %1104 = vmatprep.subr.bf16.mxu0 0
          %1105 = vmatpush1.bf16.xpose.msra.mxu0 %v1102
          %1106 = vmatprep.subr.bf16.mxu0 0
          %1107 = vmatpush1.bf16.xpose.msra.mxu0 0
          %1108 = vmatprep.subr.bf16.mxu0 0
          %1109 = vmatpush1.bf16.xpose.msra.mxu0 0
          %1110 = vmatprep.subr.bf16.mxu0 0
          %1111 = vmatpush1.bf16.xpose.msra.mxu0 0
          %1112 = vmatprep.subr.bf16.mxu0 0
          %1113 = vmatpush1.bf16.xpose.msra.mxu0 0
          %1114 = vmatprep.subr.bf16.mxu0 0
          %1115 = vmatpush1.bf16.xpose.msra.mxu0 0
          %1116 = vmatprep.subr.bf16.mxu0 0
          %1117 = vmatpush1.bf16.xpose.msra.mxu0 0
          %1118 = vmatprep.subr.bf16.mxu0 0
          %1119 = vmatpush1.bf16.xpose.msra.mxu0 0
          %1120 = vmatprep.subr.bf16.mxu0 0
          %1121 = vmatpush1.bf16.xpose.msra.mxu0 0
          %1122 = vmatprep.subr.bf16.mxu0 0
          %1123 = vmatpush1.bf16.xpose.msra.mxu0 0
          %1124 = vmatprep.subr.bf16.mxu0 0
          %1125 = vmatpush1.bf16.xpose.msra.mxu0 0
          %1126 = vmatprep.subr.bf16.mxu0 0
          %1127 = vmatpush1.bf16.xpose.msra.mxu0 0
          %1128 = vmatprep.subr.bf16.mxu0 0
          %1129 = vmatpush1.bf16.xpose.msra.mxu0 0
          %1130 = vmatprep.subr.bf16.mxu0 0
          %1131 = vmatpush1.bf16.xpose.msra.mxu0 0
          %1132 = vmatprep.subr.bf16.mxu0 0
          %1133 = vmatpush1.bf16.xpose.msra.mxu0 0
          %1134 = vmatprep.subr.bf16.mxu0 0
          %1135 = vmatpush1.bf16.xpose.msra.mxu0 0
          %1136 = vmatprep.mubr.bf16.mxu0 0
          %1137 = vmatmul.mubr.bf16.gmra.mrb[0].mxu0 %v1099
          %v1138 = vpop.f32.mrb[0].mxu0
          %v1139 = vadd.f32 0.0, %v1138
          %v1140 = vpop.f32.mrb[0].mxu0
          %v1141 = vpop.f32.mrb[0].mxu0
          %v1142 = vadd.f32 0.0, %v1141
          %v1143 = vpop.f32.mrb[0].mxu0
          %1144 = vdwg.mxu0
          %v1145 = vmul.f32 %v1139, 0.35355338
          %v1146 = vmul.f32 %v1142, 0.35355338
          %v1147 = vadd.f32 %v1145, %v1081
          %v1148 = vadd.f32 %v1146, %v1081
          %vm1149 = vcmask 130048
          %v1150 = vsel %vm1149, %v1147, -inf
          %1151 = vmax.xlane.f32.xlu0 %v1150
          %v1152 = vpop.xlane.xlu0 %1151
          %v1153 = vsel %vm1149, %v1148, -inf
          %1154 = vmax.xlane.f32.xlu0 %v1153
          %v1155 = vpop.xlane.xlu0 %1154
          %v1156 = vsub.f32 %v1147, %v1152
          %v1157 = vsub.f32 %v1148, %v1155
          %v1158 = vmul.f32 %v1156, 1.442695
          %v1159 = vpow.pop %v1158
          %v1160 = vmul.f32 %v1157, 1.442695
          %v1161 = vpow.pop %v1160
          %v1162 = vsel %vm1149, %v1159, 0.0
          %1163 = vadd.xlane.f32.xlu0 %v1162
          %v1164 = vpop.xlane.xlu0 %1163
          %v1165 = vsel %vm1149, %v1161, 0.0
          %1166 = vadd.xlane.f32.xlu0 %v1165
          %v1167 = vpop.xlane.xlu0 %1166
          %v1168 = vrcp.pop %v1164
          %v1169 = vrcp.pop %v1167
          %v1170 = vmul.f32 %v1159, %v1168
          %v1171 = vmul.f32 %v1161, %v1169
          %v1172 = vpack.c.bf16 %v1171, %v1170
          %1173 = vrot.lane.b32.xlu0 %v1093, 64
          %v1174 = vpop.permute.xlu0 %1173
          %v1177 = vsel %vm1149, %v1172, 0
          %1179 = vmatprep.subr.bf16.mxu0 0
          %1180 = vmatpush1.bf16.msra.mxu0 %v1174
          %1181 = vmatprep.subr.bf16.mxu0 0
          %1182 = vmatpush1.bf16.msra.mxu0 0
          %1183 = vmatprep.subr.bf16.mxu0 0
          %1184 = vmatpush1.bf16.msra.mxu0 0
          %1185 = vmatprep.subr.bf16.mxu0 0
          %1186 = vmatpush1.bf16.msra.mxu0 0
          %1187 = vmatprep.subr.bf16.mxu0 0
          %1188 = vmatpush1.bf16.msra.mxu0 0
          %1189 = vmatprep.subr.bf16.mxu0 0
          %1190 = vmatpush1.bf16.msra.mxu0 0
          %1191 = vmatprep.subr.bf16.mxu0 0
          %1192 = vmatpush1.bf16.msra.mxu0 0
          %1193 = vmatprep.subr.bf16.mxu0 0
          %1194 = vmatpush1.bf16.msra.mxu0 0
          %1195 = vmatprep.subr.bf16.mxu0 0
          %1196 = vmatpush1.bf16.msra.mxu0 0
          %1197 = vmatprep.subr.bf16.mxu0 0
          %1198 = vmatpush1.bf16.msra.mxu0 0
          %1199 = vmatprep.subr.bf16.mxu0 0
          %1200 = vmatpush1.bf16.msra.mxu0 0
          %1201 = vmatprep.subr.bf16.mxu0 0
          %1202 = vmatpush1.bf16.msra.mxu0 0
          %1203 = vmatprep.subr.bf16.mxu0 0
          %1204 = vmatpush1.bf16.msra.mxu0 0
          %1205 = vmatprep.subr.bf16.mxu0 0
          %1206 = vmatpush1.bf16.msra.mxu0 0
          %1207 = vmatprep.subr.bf16.mxu0 0
          %1208 = vmatpush1.bf16.msra.mxu0 0
          %1209 = vmatprep.subr.bf16.mxu0 0
          %1210 = vmatpush1.bf16.msra.mxu0 0
          %1211 = vmatprep.mubr.bf16.mxu0 0
          %1212 = vmatmul.mubr.bf16.gmra.mrb[0].mxu0 %v1177
          %v1213 = vpop.f32.mrb[0].mxu0
          %v1214 = vadd.f32 0.0, %v1213
          %v1215 = vpop.f32.mrb[0].mxu0
          %v1216 = vpop.f32.mrb[0].mxu0
          %v1217 = vadd.f32 0.0, %v1216
          %v1218 = vpop.f32.mrb[0].mxu0
          %1219 = vdwg.mxu0
          %1220 = vrot.lane.b32.xlu0 %v1093, 120
          %v1221 = vpop.permute.xlu0 %1220
          %1222 = vrot.lane.b32.xlu0 %v1093, 88
          %v1223 = vpop.permute.xlu0 %1222
          %v1225 = vsel %vm1097, %v1221, 0
          %v1228 = vsel %vm1097, %v1223, 0
          %1230 = vmatprep.subr.bf16.mxu0 0
          %1231 = vmatpush1.bf16.xpose.msra.mxu0 %v1228
          %1232 = vmatprep.subr.bf16.mxu0 0
          %1233 = vmatpush1.bf16.xpose.msra.mxu0 0
          %1234 = vmatprep.subr.bf16.mxu0 0
          %1235 = vmatpush1.bf16.xpose.msra.mxu0 0
          %1236 = vmatprep.subr.bf16.mxu0 0
          %1237 = vmatpush1.bf16.xpose.msra.mxu0 0
          %1238 = vmatprep.subr.bf16.mxu0 0
          %1239 = vmatpush1.bf16.xpose.msra.mxu0 0
          %1240 = vmatprep.subr.bf16.mxu0 0
          %1241 = vmatpush1.bf16.xpose.msra.mxu0 0
          %1242 = vmatprep.subr.bf16.mxu0 0
          %1243 = vmatpush1.bf16.xpose.msra.mxu0 0
          %1244 = vmatprep.subr.bf16.mxu0 0
          %1245 = vmatpush1.bf16.xpose.msra.mxu0 0
          %1246 = vmatprep.subr.bf16.mxu0 0
          %1247 = vmatpush1.bf16.xpose.msra.mxu0 0
          %1248 = vmatprep.subr.bf16.mxu0 0
          %1249 = vmatpush1.bf16.xpose.msra.mxu0 0
          %1250 = vmatprep.subr.bf16.mxu0 0
          %1251 = vmatpush1.bf16.xpose.msra.mxu0 0
          %1252 = vmatprep.subr.bf16.mxu0 0
          %1253 = vmatpush1.bf16.xpose.msra.mxu0 0
          %1254 = vmatprep.subr.bf16.mxu0 0
          %1255 = vmatpush1.bf16.xpose.msra.mxu0 0
          %1256 = vmatprep.subr.bf16.mxu0 0
          %1257 = vmatpush1.bf16.xpose.msra.mxu0 0
          %1258 = vmatprep.subr.bf16.mxu0 0
          %1259 = vmatpush1.bf16.xpose.msra.mxu0 0
          %1260 = vmatprep.subr.bf16.mxu0 0
          %1261 = vmatpush1.bf16.xpose.msra.mxu0 0
          %1262 = vmatprep.mubr.bf16.mxu0 0
          %1263 = vmatmul.mubr.bf16.gmra.mrb[0].mxu0 %v1225
          %v1264 = vpop.f32.mrb[0].mxu0
          %v1265 = vadd.f32 0.0, %v1264
          %v1266 = vpop.f32.mrb[0].mxu0
          %v1267 = vpop.f32.mrb[0].mxu0
          %v1268 = vadd.f32 0.0, %v1267
          %v1269 = vpop.f32.mrb[0].mxu0
          %1270 = vdwg.mxu0
          %v1271 = vmul.f32 %v1265, 0.35355338
          %v1272 = vmul.f32 %v1268, 0.35355338
          %v1273 = vadd.f32 %v1271, %v1081
          %v1274 = vadd.f32 %v1272, %v1081
          %v1275 = vsel %vm1149, %v1273, -inf
          %1276 = vmax.xlane.f32.xlu0 %v1275
          %v1277 = vpop.xlane.xlu0 %1276
          %v1278 = vsel %vm1149, %v1274, -inf
          %1279 = vmax.xlane.f32.xlu0 %v1278
          %v1280 = vpop.xlane.xlu0 %1279
          %v1281 = vsub.f32 %v1273, %v1277
          %v1282 = vsub.f32 %v1274, %v1280
          %v1283 = vmul.f32 %v1281, 1.442695
          %v1284 = vpow.pop %v1283
          %v1285 = vmul.f32 %v1282, 1.442695
          %v1286 = vpow.pop %v1285
          %v1287 = vsel %vm1149, %v1284, 0.0
          %1288 = vadd.xlane.f32.xlu0 %v1287
          %v1289 = vpop.xlane.xlu0 %1288
          %v1290 = vsel %vm1149, %v1286, 0.0
          %1291 = vadd.xlane.f32.xlu0 %v1290
          %v1292 = vpop.xlane.xlu0 %1291
          %v1293 = vrcp.pop %v1289
          %v1294 = vrcp.pop %v1292
          %v1295 = vmul.f32 %v1284, %v1293
          %v1296 = vmul.f32 %v1286, %v1294
          %v1297 = vpack.c.bf16 %v1296, %v1295
          %1298 = vrot.lane.b32.xlu0 %v1093, 56
          %v1299 = vpop.permute.xlu0 %1298
          %v1302 = vsel %vm1149, %v1297, 0
          %1304 = vmatprep.subr.bf16.mxu0 0
          %1305 = vmatpush1.bf16.msra.mxu0 %v1299
          %1306 = vmatprep.subr.bf16.mxu0 0
          %1307 = vmatpush1.bf16.msra.mxu0 0
          %1308 = vmatprep.subr.bf16.mxu0 0
          %1309 = vmatpush1.bf16.msra.mxu0 0
          %1310 = vmatprep.subr.bf16.mxu0 0
          %1311 = vmatpush1.bf16.msra.mxu0 0
          %1312 = vmatprep.subr.bf16.mxu0 0
          %1313 = vmatpush1.bf16.msra.mxu0 0
          %1314 = vmatprep.subr.bf16.mxu0 0
          %1315 = vmatpush1.bf16.msra.mxu0 0
          %1316 = vmatprep.subr.bf16.mxu0 0
          %1317 = vmatpush1.bf16.msra.mxu0 0
          %1318 = vmatprep.subr.bf16.mxu0 0
          %1319 = vmatpush1.bf16.msra.mxu0 0
          %1320 = vmatprep.subr.bf16.mxu0 0
          %1321 = vmatpush1.bf16.msra.mxu0 0
          %1322 = vmatprep.subr.bf16.mxu0 0
          %1323 = vmatpush1.bf16.msra.mxu0 0
          %1324 = vmatprep.subr.bf16.mxu0 0
          %1325 = vmatpush1.bf16.msra.mxu0 0
          %1326 = vmatprep.subr.bf16.mxu0 0
          %1327 = vmatpush1.bf16.msra.mxu0 0
          %1328 = vmatprep.subr.bf16.mxu0 0
          %1329 = vmatpush1.bf16.msra.mxu0 0
          %1330 = vmatprep.subr.bf16.mxu0 0
          %1331 = vmatpush1.bf16.msra.mxu0 0
          %1332 = vmatprep.subr.bf16.mxu0 0
          %1333 = vmatpush1.bf16.msra.mxu0 0
          %1334 = vmatprep.subr.bf16.mxu0 0
          %1335 = vmatpush1.bf16.msra.mxu0 0
          %1336 = vmatprep.mubr.bf16.mxu0 0
          %1337 = vmatmul.mubr.bf16.gmra.mrb[0].mxu0 %v1302
          %v1338 = vpop.f32.mrb[0].mxu0
          %v1339 = vadd.f32 0.0, %v1338
          %v1340 = vpop.f32.mrb[0].mxu0
          %v1341 = vpop.f32.mrb[0].mxu0
          %v1342 = vadd.f32 0.0, %v1341
          %v1343 = vpop.f32.mrb[0].mxu0
          %1344 = vdwg.mxu0
          %1347 = vrot.lane.b32.xlu0 %v1339, 8
          %v1348 = vpop.permute.xlu0 %1347
          %1349 = vrot.lane.b32.xlu0 %v1342, 8
          %v1350 = vpop.permute.xlu0 %1349
          %v1353 = vsel %vm1097, %v1214, %v1348
          %v1354 = vsel %vm1097, %v1217, %v1350
          %v1355 = vpack.c.bf16 %v1354, %v1353
          %s1356 = smul.addr %s1089, 8
          %s1357 = scalar_lea.vmem [#allocation4], %s1356
          %1358 = vst.msk [vmem:[%s1357] sm:$0xff] %vm1149, %v1355
          %v1359 = vld [vmem:[%s1092] sm:$0xff]
          %1361 = vrot.lane.b32.xlu0 %v1359, 112
          %v1362 = vpop.permute.xlu0 %1361
          %1363 = vrot.lane.b32.xlu0 %v1359, 80
          %v1364 = vpop.permute.xlu0 %1363
          %v1366 = vsel %vm1097, %v1362, 0
          %v1369 = vsel %vm1097, %v1364, 0
          %1371 = vmatprep.subr.bf16.mxu0 0
          %1372 = vmatpush1.bf16.xpose.msra.mxu0 %v1369
          %1373 = vmatprep.subr.bf16.mxu0 0
          %1374 = vmatpush1.bf16.xpose.msra.mxu0 0
          %1375 = vmatprep.subr.bf16.mxu0 0
          %1376 = vmatpush1.bf16.xpose.msra.mxu0 0
          %1377 = vmatprep.subr.bf16.mxu0 0
          %1378 = vmatpush1.bf16.xpose.msra.mxu0 0
          %1379 = vmatprep.subr.bf16.mxu0 0
          %1380 = vmatpush1.bf16.xpose.msra.mxu0 0
          %1381 = vmatprep.subr.bf16.mxu0 0
          %1382 = vmatpush1.bf16.xpose.msra.mxu0 0
          %1383 = vmatprep.subr.bf16.mxu0 0
          %1384 = vmatpush1.bf16.xpose.msra.mxu0 0
          %1385 = vmatprep.subr.bf16.mxu0 0
          %1386 = vmatpush1.bf16.xpose.msra.mxu0 0
          %1387 = vmatprep.subr.bf16.mxu0 0
          %1388 = vmatpush1.bf16.xpose.msra.mxu0 0
          %1389 = vmatprep.subr.bf16.mxu0 0
          %1390 = vmatpush1.bf16.xpose.msra.mxu0 0
          %1391 = vmatprep.subr.bf16.mxu0 0
          %1392 = vmatpush1.bf16.xpose.msra.mxu0 0
          %1393 = vmatprep.subr.bf16.mxu0 0
          %1394 = vmatpush1.bf16.xpose.msra.mxu0 0
          %1395 = vmatprep.subr.bf16.mxu0 0
          %1396 = vmatpush1.bf16.xpose.msra.mxu0 0
          %1397 = vmatprep.subr.bf16.mxu0 0
          %1398 = vmatpush1.bf16.xpose.msra.mxu0 0
          %1399 = vmatprep.subr.bf16.mxu0 0
          %1400 = vmatpush1.bf16.xpose.msra.mxu0 0
          %1401 = vmatprep.subr.bf16.mxu0 0
          %1402 = vmatpush1.bf16.xpose.msra.mxu0 0
          %1403 = vmatprep.mubr.bf16.mxu0 0
          %1404 = vmatmul.mubr.bf16.gmra.mrb[0].mxu0 %v1366
          %v1405 = vpop.f32.mrb[0].mxu0
          %v1406 = vadd.f32 0.0, %v1405
          %v1407 = vpop.f32.mrb[0].mxu0
          %v1408 = vpop.f32.mrb[0].mxu0
          %v1409 = vadd.f32 0.0, %v1408
          %v1410 = vpop.f32.mrb[0].mxu0
          %1411 = vdwg.mxu0
          %v1412 = vmul.f32 %v1406, 0.35355338
          %v1413 = vmul.f32 %v1409, 0.35355338
          %v1414 = vadd.f32 %v1412, %v1081
          %v1415 = vadd.f32 %v1413, %v1081
          %v1416 = vsel %vm1149, %v1414, -inf
          %1417 = vmax.xlane.f32.xlu0 %v1416
          %v1418 = vpop.xlane.xlu0 %1417
          %v1419 = vsel %vm1149, %v1415, -inf
          %1420 = vmax.xlane.f32.xlu0 %v1419
          %v1421 = vpop.xlane.xlu0 %1420
          %v1422 = vsub.f32 %v1414, %v1418
          %v1423 = vsub.f32 %v1415, %v1421
          %v1424 = vmul.f32 %v1422, 1.442695
          %v1425 = vpow.pop %v1424
          %v1426 = vmul.f32 %v1423, 1.442695
          %v1427 = vpow.pop %v1426
          %v1428 = vsel %vm1149, %v1425, 0.0
          %1429 = vadd.xlane.f32.xlu0 %v1428
          %v1430 = vpop.xlane.xlu0 %1429
          %v1431 = vsel %vm1149, %v1427, 0.0
          %1432 = vadd.xlane.f32.xlu0 %v1431
          %v1433 = vpop.xlane.xlu0 %1432
          %v1434 = vrcp.pop %v1430
          %v1435 = vrcp.pop %v1433
          %v1436 = vmul.f32 %v1425, %v1434
          %v1437 = vmul.f32 %v1427, %v1435
          %v1438 = vpack.c.bf16 %v1437, %v1436
          %1439 = vrot.lane.b32.xlu0 %v1359, 48
          %v1440 = vpop.permute.xlu0 %1439
          %v1443 = vsel %vm1149, %v1438, 0
          %1445 = vmatprep.subr.bf16.mxu0 0
          %1446 = vmatpush1.bf16.msra.mxu0 %v1440
          %1447 = vmatprep.subr.bf16.mxu0 0
          %1448 = vmatpush1.bf16.msra.mxu0 0
          %1449 = vmatprep.subr.bf16.mxu0 0
          %1450 = vmatpush1.bf16.msra.mxu0 0
          %1451 = vmatprep.subr.bf16.mxu0 0
          %1452 = vmatpush1.bf16.msra.mxu0 0
          %1453 = vmatprep.subr.bf16.mxu0 0
          %1454 = vmatpush1.bf16.msra.mxu0 0
          %1455 = vmatprep.subr.bf16.mxu0 0
          %1456 = vmatpush1.bf16.msra.mxu0 0
          %1457 = vmatprep.subr.bf16.mxu0 0
          %1458 = vmatpush1.bf16.msra.mxu0 0
          %1459 = vmatprep.subr.bf16.mxu0 0
          %1460 = vmatpush1.bf16.msra.mxu0 0
          %1461 = vmatprep.subr.bf16.mxu0 0
          %1462 = vmatpush1.bf16.msra.mxu0 0
          %1463 = vmatprep.subr.bf16.mxu0 0
          %1464 = vmatpush1.bf16.msra.mxu0 0
          %1465 = vmatprep.subr.bf16.mxu0 0
          %1466 = vmatpush1.bf16.msra.mxu0 0
          %1467 = vmatprep.subr.bf16.mxu0 0
          %1468 = vmatpush1.bf16.msra.mxu0 0
          %1469 = vmatprep.subr.bf16.mxu0 0
          %1470 = vmatpush1.bf16.msra.mxu0 0
          %1471 = vmatprep.subr.bf16.mxu0 0
          %1472 = vmatpush1.bf16.msra.mxu0 0
          %1473 = vmatprep.subr.bf16.mxu0 0
          %1474 = vmatpush1.bf16.msra.mxu0 0
          %1475 = vmatprep.subr.bf16.mxu0 0
          %1476 = vmatpush1.bf16.msra.mxu0 0
          %1477 = vmatprep.mubr.bf16.mxu0 0
          %1478 = vmatmul.mubr.bf16.gmra.mrb[0].mxu0 %v1443
          %v1479 = vpop.f32.mrb[0].mxu0
          %v1480 = vadd.f32 0.0, %v1479
          %v1481 = vpop.f32.mrb[0].mxu0
          %v1482 = vpop.f32.mrb[0].mxu0
          %v1483 = vadd.f32 0.0, %v1482
          %v1484 = vpop.f32.mrb[0].mxu0
          %1485 = vdwg.mxu0
          %1486 = vrot.lane.b32.xlu0 %v1359, 104
          %v1487 = vpop.permute.xlu0 %1486
          %1488 = vrot.lane.b32.xlu0 %v1359, 72
          %v1489 = vpop.permute.xlu0 %1488
          %v1491 = vsel %vm1097, %v1487, 0
          %v1494 = vsel %vm1097, %v1489, 0
          %1496 = vmatprep.subr.bf16.mxu0 0
          %1497 = vmatpush1.bf16.xpose.msra.mxu0 %v1494
          %1498 = vmatprep.subr.bf16.mxu0 0
          %1499 = vmatpush1.bf16.xpose.msra.mxu0 0
          %1500 = vmatprep.subr.bf16.mxu0 0
          %1501 = vmatpush1.bf16.xpose.msra.mxu0 0
          %1502 = vmatprep.subr.bf16.mxu0 0
          %1503 = vmatpush1.bf16.xpose.msra.mxu0 0
          %1504 = vmatprep.subr.bf16.mxu0 0
          %1505 = vmatpush1.bf16.xpose.msra.mxu0 0
          %1506 = vmatprep.subr.bf16.mxu0 0
          %1507 = vmatpush1.bf16.xpose.msra.mxu0 0
          %1508 = vmatprep.subr.bf16.mxu0 0
          %1509 = vmatpush1.bf16.xpose.msra.mxu0 0
          %1510 = vmatprep.subr.bf16.mxu0 0
          %1511 = vmatpush1.bf16.xpose.msra.mxu0 0
          %1512 = vmatprep.subr.bf16.mxu0 0
          %1513 = vmatpush1.bf16.xpose.msra.mxu0 0
          %1514 = vmatprep.subr.bf16.mxu0 0
          %1515 = vmatpush1.bf16.xpose.msra.mxu0 0
          %1516 = vmatprep.subr.bf16.mxu0 0
          %1517 = vmatpush1.bf16.xpose.msra.mxu0 0
          %1518 = vmatprep.subr.bf16.mxu0 0
          %1519 = vmatpush1.bf16.xpose.msra.mxu0 0
          %1520 = vmatprep.subr.bf16.mxu0 0
          %1521 = vmatpush1.bf16.xpose.msra.mxu0 0
          %1522 = vmatprep.subr.bf16.mxu0 0
          %1523 = vmatpush1.bf16.xpose.msra.mxu0 0
          %1524 = vmatprep.subr.bf16.mxu0 0
          %1525 = vmatpush1.bf16.xpose.msra.mxu0 0
          %1526 = vmatprep.subr.bf16.mxu0 0
          %1527 = vmatpush1.bf16.xpose.msra.mxu0 0
          %1528 = vmatprep.mubr.bf16.mxu0 0
          %1529 = vmatmul.mubr.bf16.gmra.mrb[0].mxu0 %v1491
          %v1530 = vpop.f32.mrb[0].mxu0
          %v1531 = vadd.f32 0.0, %v1530
          %v1532 = vpop.f32.mrb[0].mxu0
          %v1533 = vpop.f32.mrb[0].mxu0
          %v1534 = vadd.f32 0.0, %v1533
          %v1535 = vpop.f32.mrb[0].mxu0
          %1536 = vdwg.mxu0
          %v1537 = vmul.f32 %v1531, 0.35355338
          %v1538 = vmul.f32 %v1534, 0.35355338
          %v1539 = vadd.f32 %v1537, %v1081
          %v1540 = vadd.f32 %v1538, %v1081
          %v1541 = vsel %vm1149, %v1539, -inf
          %1542 = vmax.xlane.f32.xlu0 %v1541
          %v1543 = vpop.xlane.xlu0 %1542
          %v1544 = vsel %vm1149, %v1540, -inf
          %1545 = vmax.xlane.f32.xlu0 %v1544
          %v1546 = vpop.xlane.xlu0 %1545
          %v1547 = vsub.f32 %v1539, %v1543
          %v1548 = vsub.f32 %v1540, %v1546
          %v1549 = vmul.f32 %v1547, 1.442695
          %v1550 = vpow.pop %v1549
          %v1551 = vmul.f32 %v1548, 1.442695
          %v1552 = vpow.pop %v1551
          %v1553 = vsel %vm1149, %v1550, 0.0
          %1554 = vadd.xlane.f32.xlu0 %v1553
          %v1555 = vpop.xlane.xlu0 %1554
          %v1556 = vsel %vm1149, %v1552, 0.0
          %1557 = vadd.xlane.f32.xlu0 %v1556
          %v1558 = vpop.xlane.xlu0 %1557
          %v1559 = vrcp.pop %v1555
          %v1560 = vrcp.pop %v1558
          %v1561 = vmul.f32 %v1550, %v1559
          %v1562 = vmul.f32 %v1552, %v1560
          %v1563 = vpack.c.bf16 %v1562, %v1561
          %1564 = vrot.lane.b32.xlu0 %v1359, 40
          %v1565 = vpop.permute.xlu0 %1564
          %v1568 = vsel %vm1149, %v1563, 0
          %1570 = vmatprep.subr.bf16.mxu0 0
          %1571 = vmatpush1.bf16.msra.mxu0 %v1565
          %1572 = vmatprep.subr.bf16.mxu0 0
          %1573 = vmatpush1.bf16.msra.mxu0 0
          %1574 = vmatprep.subr.bf16.mxu0 0
          %1575 = vmatpush1.bf16.msra.mxu0 0
          %1576 = vmatprep.subr.bf16.mxu0 0
          %1577 = vmatpush1.bf16.msra.mxu0 0
          %1578 = vmatprep.subr.bf16.mxu0 0
          %1579 = vmatpush1.bf16.msra.mxu0 0
          %1580 = vmatprep.subr.bf16.mxu0 0
          %1581 = vmatpush1.bf16.msra.mxu0 0
          %1582 = vmatprep.subr.bf16.mxu0 0
          %1583 = vmatpush1.bf16.msra.mxu0 0
          %1584 = vmatprep.subr.bf16.mxu0 0
          %1585 = vmatpush1.bf16.msra.mxu0 0
          %1586 = vmatprep.subr.bf16.mxu0 0
          %1587 = vmatpush1.bf16.msra.mxu0 0
          %1588 = vmatprep.subr.bf16.mxu0 0
          %1589 = vmatpush1.bf16.msra.mxu0 0
          %1590 = vmatprep.subr.bf16.mxu0 0
          %1591 = vmatpush1.bf16.msra.mxu0 0
          %1592 = vmatprep.subr.bf16.mxu0 0
          %1593 = vmatpush1.bf16.msra.mxu0 0
          %1594 = vmatprep.subr.bf16.mxu0 0
          %1595 = vmatpush1.bf16.msra.mxu0 0
          %1596 = vmatprep.subr.bf16.mxu0 0
          %1597 = vmatpush1.bf16.msra.mxu0 0
          %1598 = vmatprep.subr.bf16.mxu0 0
          %1599 = vmatpush1.bf16.msra.mxu0 0
          %1600 = vmatprep.subr.bf16.mxu0 0
          %1601 = vmatpush1.bf16.msra.mxu0 0
          %1602 = vmatprep.mubr.bf16.mxu0 0
          %1603 = vmatmul.mubr.bf16.gmra.mrb[0].mxu0 %v1568
          %v1604 = vpop.f32.mrb[0].mxu0
          %v1605 = vadd.f32 0.0, %v1604
          %v1606 = vpop.f32.mrb[0].mxu0
          %v1607 = vpop.f32.mrb[0].mxu0
          %v1608 = vadd.f32 0.0, %v1607
          %v1609 = vpop.f32.mrb[0].mxu0
          %1610 = vdwg.mxu0
          %1613 = vrot.lane.b32.xlu0 %v1605, 8
          %v1614 = vpop.permute.xlu0 %1613
          %1615 = vrot.lane.b32.xlu0 %v1608, 8
          %v1616 = vpop.permute.xlu0 %1615
          %v1619 = vsel %vm1097, %v1480, %v1614
          %v1620 = vsel %vm1097, %v1483, %v1616
          %v1621 = vpack.c.bf16 %v1620, %v1619
          %1623 = vrot.lane.b32.xlu0 %v1621, 16
          %v1624 = vpop.permute.xlu0 %1623
          %vm1626 = vcmask 261248
          %1627 = vst.msk [vmem:[%s1357] sm:$0xff] %vm1626, %v1624
        $region89: #{tpu_custom_call.1} parent=79 // loop_footer
          %s1087 = sadd.s32 1, %s1083
        $region90: #{tpu_custom_call.1} parent=79 // loop_footer_branch
          %1082 = sbr.rel target = $region86
        $region91: #{tpu_custom_call.1} parent=79 // loop_exit
          _
        %v1628 = vld [vmem:[#allocation2] sm:$0xff]
        %v1629 = vld [vmem:[#allocation2 + $0x8] sm:$0xff]
        %v1630 = vld [vmem:[#allocation2 + $0x10] sm:$0xff]
        %v1631 = vld [vmem:[#allocation2 + $0x18] sm:$0xff]
        %v1632 = vld [vmem:[#allocation4] sm:$0xff]
        %v1633 = vld [vmem:[#allocation4 + $0x8] sm:$0xff]
        %v1634 = vld [vmem:[%s669] sm:$0xf]
        %v1635 = vld [vmem:[%s669 + $0x4] sm:$0xf]
        %v1636 = vld [vmem:[%s669 + $0x8] sm:$0xf]
        %v1637 = vld [vmem:[%s669 + $0xc] sm:$0xf]
        %v1642 = vunpack.c.l.b16 %v1634
        %v1643 = vunpack.c.l.b16 %v1635
        %v1644 = vunpack.c.l.b16 %v1636
        %v1645 = vunpack.c.l.b16 %v1637
        %v1646 = vpack.c.b16 %v1643, %v1642
        %v1647 = vpack.c.b16 %v1645, %v1644
        %v1651 = vsel %vm919, %v1632, 0
        %v1654 = vsel %vm919, %v1633, 0
        %1656 = vmatprep.subr.bf16.mxu0 0
        %1657 = vmatpush1.bf16.msra.mxu0 %v1646
        %1658 = vmatprep.subr.bf16.mxu0 0
        %1659 = vmatpush1.bf16.msra.mxu0 %v1647
        %1660 = vmatprep.subr.bf16.mxu0 0
        %1661 = vmatpush1.bf16.msra.mxu0 0
        %1662 = vmatprep.subr.bf16.mxu0 0
        %1663 = vmatpush1.bf16.msra.mxu0 0
        %1664 = vmatprep.subr.bf16.mxu0 0
        %1665 = vmatpush1.bf16.msra.mxu0 0
        %1666 = vmatprep.subr.bf16.mxu0 0
        %1667 = vmatpush1.bf16.msra.mxu0 0
        %1668 = vmatprep.subr.bf16.mxu0 0
        %1669 = vmatpush1.bf16.msra.mxu0 0
        %1670 = vmatprep.subr.bf16.mxu0 0
        %1671 = vmatpush1.bf16.msra.mxu0 0
        %1672 = vmatprep.subr.bf16.mxu0 0
        %1673 = vmatpush1.bf16.msra.mxu0 0
        %1674 = vmatprep.subr.bf16.mxu0 0
        %1675 = vmatpush1.bf16.msra.mxu0 0
        %1676 = vmatprep.subr.bf16.mxu0 0
        %1677 = vmatpush1.bf16.msra.mxu0 0
        %1678 = vmatprep.subr.bf16.mxu0 0
        %1679 = vmatpush1.bf16.msra.mxu0 0
        %1680 = vmatprep.subr.bf16.mxu0 0
        %1681 = vmatpush1.bf16.msra.mxu0 0
        %1682 = vmatprep.subr.bf16.mxu0 0
        %1683 = vmatpush1.bf16.msra.mxu0 0
        %1684 = vmatprep.subr.bf16.mxu0 0
        %1685 = vmatpush1.bf16.msra.mxu0 0
        %1686 = vmatprep.subr.bf16.mxu0 0
        %1687 = vmatpush1.bf16.msra.mxu0 0
        %1688 = vmatprep.mubr.bf16.mxu0 0
        %1689 = vmatmul.mubr.bf16.gmra.mrb[0].mxu0 %v1651
        %v1690 = vpop.f32.mrb[0].mxu0
        %v1691 = vadd.f32 0.0, %v1690
        %v1692 = vpop.f32.mrb[0].mxu0
        %v1693 = vpop.f32.mrb[0].mxu0
        %v1694 = vadd.f32 0.0, %v1693
        %v1695 = vpop.f32.mrb[0].mxu0
        %1696 = vmatprep.mubr.bf16.mxu0 0
        %1697 = vmatmul.mubr.bf16.gmra.mrb[0].mxu0 %v1654
        %v1698 = vpop.f32.mrb[0].mxu0
        %v1699 = vadd.f32 0.0, %v1698
        %v1700 = vpop.f32.mrb[0].mxu0
        %v1701 = vpop.f32.mrb[0].mxu0
        %v1702 = vadd.f32 0.0, %v1701
        %v1703 = vpop.f32.mrb[0].mxu0
        %1704 = vdwg.mxu0
        %v1705 = vadd.f32 %v1628, %v1691
        %v1706 = vadd.f32 %v1629, %v1694
        %v1707 = vadd.f32 %v1630, %v1699
        %v1708 = vadd.f32 %v1631, %v1702
        %v1709 = vld [vmem:[%s672] sm:$0x1]
        %v1711 = vlaneseq
        %v1712 = vshrl.u32 %v1711, 7
        %v1713 = vsub.s32 0, %v1712
        %v1714 = vrot.slane %v1709, %v1713
        %v1716 = vadd.f32 %v1705, %v1714
        %v1717 = vadd.f32 %v1706, %v1714
        %v1718 = vadd.f32 %v1707, %v1714
        %v1719 = vadd.f32 %v1708, %v1714
        %1720 = vst.msk [vmem:[#allocation2] sm:$0xff] %vm919, %v1716
        %1721 = vst.msk [vmem:[#allocation2 + $0x8] sm:$0xff] %vm919, %v1717
        %1722 = vst.msk [vmem:[#allocation2 + $0x10] sm:$0xff] %vm919, %v1718
        %1723 = vst.msk [vmem:[#allocation2 + $0x18] sm:$0xff] %vm919, %v1719
        %v1724 = vld [vmem:[#allocation2] sm:$0xff]
        %v1725 = vld [vmem:[#allocation2 + $0x8] sm:$0xff]
        %v1726 = vld [vmem:[#allocation2 + $0x10] sm:$0xff]
        %v1727 = vld [vmem:[#allocation2 + $0x18] sm:$0xff]
        %v1728 = vld [vmem:[%s675] sm:$0x1]
        %v1729 = vld [vmem:[%s678] sm:$0x1]
        %v1730 = vsel %vm919, %v1724, 0.0
        %1731 = vadd.xlane.f32.xlu0 %v1730
        %v1732 = vpop.xlane.xlu0 %1731
        %v1733 = vsel %vm919, %v1725, 0.0
        %1734 = vadd.xlane.f32.xlu0 %v1733
        %v1735 = vpop.xlane.xlu0 %1734
        %v1736 = vsel %vm919, %v1726, 0.0
        %1737 = vadd.xlane.f32.xlu0 %v1736
        %v1738 = vpop.xlane.xlu0 %1737
        %v1739 = vsel %vm919, %v1727, 0.0
        %1740 = vadd.xlane.f32.xlu0 %v1739
        %v1741 = vpop.xlane.xlu0 %1740
        %v1742 = vmul.f32 %v1732, %v932
        %v1743 = vmul.f32 %v1735, %v932
        %v1744 = vmul.f32 %v1738, %v932
        %v1745 = vmul.f32 %v1741, %v932
        %v1746 = vsub.f32 %v1724, %v1742
        %v1747 = vsub.f32 %v1725, %v1743
        %v1748 = vsub.f32 %v1726, %v1744
        %v1749 = vsub.f32 %v1727, %v1745
        %v1750 = vmul.f32 %v1746, %v1746
        %v1751 = vmul.f32 %v1747, %v1747
        %v1752 = vmul.f32 %v1748, %v1748
        %v1753 = vmul.f32 %v1749, %v1749
        %v1754 = vsel %vm919, %v1750, 0.0
        %1755 = vadd.xlane.f32.xlu0 %v1754
        %v1756 = vpop.xlane.xlu0 %1755
        %v1757 = vsel %vm919, %v1751, 0.0
        %1758 = vadd.xlane.f32.xlu0 %v1757
        %v1759 = vpop.xlane.xlu0 %1758
        %v1760 = vsel %vm919, %v1752, 0.0
        %1761 = vadd.xlane.f32.xlu0 %v1760
        %v1762 = vpop.xlane.xlu0 %1761
        %v1763 = vsel %vm919, %v1753, 0.0
        %1764 = vadd.xlane.f32.xlu0 %v1763
        %v1765 = vpop.xlane.xlu0 %1764
        %v1766 = vmul.f32 %v1756, %v932
        %v1767 = vmul.f32 %v1759, %v932
        %v1768 = vmul.f32 %v1762, %v932
        %v1769 = vmul.f32 %v1765, %v932
        %v1770 = vadd.f32 %v1766, 1e-06
        %v1771 = vadd.f32 %v1767, 1e-06
        %v1772 = vadd.f32 %v1768, 1e-06
        %v1773 = vadd.f32 %v1769, 1e-06
        %v1774 = vrsqrt.pop %v1770
        %v1775 = vrsqrt.pop %v1771
        %v1776 = vrsqrt.pop %v1772
        %v1777 = vrsqrt.pop %v1773
        %v1778 = vmul.f32 %v1746, %v1774
        %v1779 = vmul.f32 %v1747, %v1775
        %v1780 = vmul.f32 %v1748, %v1776
        %v1781 = vmul.f32 %v1749, %v1777
        %v1783 = vlaneseq
        %v1784 = vshrl.u32 %v1783, 7
        %v1785 = vsub.s32 0, %v1784
        %v1786 = vrot.slane %v1728, %v1785
        %v1788 = vmul.f32 %v1778, %v1786
        %v1789 = vmul.f32 %v1779, %v1786
        %v1790 = vmul.f32 %v1780, %v1786
        %v1791 = vmul.f32 %v1781, %v1786
        %v1793 = vlaneseq
        %v1794 = vshrl.u32 %v1793, 7
        %v1795 = vsub.s32 0, %v1794
        %v1796 = vrot.slane %v1729, %v1795
        %v1798 = vadd.f32 %v1788, %v1796
        %v1799 = vadd.f32 %v1789, %v1796
        %v1800 = vadd.f32 %v1790, %v1796
        %v1801 = vadd.f32 %v1791, %v1796
        %v1802 = vpack.c.bf16 %v1799, %v1798
        %v1803 = vpack.c.bf16 %v1801, %v1800
        %v1804 = vld [vmem:[%s683] sm:$0xf]
        %v1805 = vld [vmem:[%s683 + $0x4] sm:$0xf]
        %v1806 = vld [vmem:[%s683 + $0x8] sm:$0xf]
        %v1807 = vld [vmem:[%s683 + $0xc] sm:$0xf]
        %v1808 = vld [vmem:[%s686] sm:$0x1]
        %v1810 = vlaneseq
        %v1811 = vshrl.u32 %v1810, 7
        %v1812 = vsub.s32 0, %v1811
        %v1813 = vrot.slane %v1808, %v1812
        %v1819 = vunpack.c.l.b16 %v1804
        %v1820 = vunpack.c.l.b16 %v1805
        %v1821 = vunpack.c.l.b16 %v1806
        %v1822 = vunpack.c.l.b16 %v1807
        %v1823 = vpack.c.b16 %v1820, %v1819
        %v1824 = vpack.c.b16 %v1822, %v1821
        %v1828 = vsel %vm919, %v1802, 0
        %v1831 = vsel %vm919, %v1803, 0
        %1833 = vmatprep.subr.bf16.mxu0 0
        %1834 = vmatpush1.bf16.msra.mxu0 %v1823
        %1835 = vmatprep.subr.bf16.mxu0 0
        %1836 = vmatpush1.bf16.msra.mxu0 %v1824
        %1837 = vmatprep.subr.bf16.mxu0 0
        %1838 = vmatpush1.bf16.msra.mxu0 0
        %1839 = vmatprep.subr.bf16.mxu0 0
        %1840 = vmatpush1.bf16.msra.mxu0 0
        %1841 = vmatprep.subr.bf16.mxu0 0
        %1842 = vmatpush1.bf16.msra.mxu0 0
        %1843 = vmatprep.subr.bf16.mxu0 0
        %1844 = vmatpush1.bf16.msra.mxu0 0
        %1845 = vmatprep.subr.bf16.mxu0 0
        %1846 = vmatpush1.bf16.msra.mxu0 0
        %1847 = vmatprep.subr.bf16.mxu0 0
        %1848 = vmatpush1.bf16.msra.mxu0 0
        %1849 = vmatprep.subr.bf16.mxu0 0
        %1850 = vmatpush1.bf16.msra.mxu0 0
        %1851 = vmatprep.subr.bf16.mxu0 0
        %1852 = vmatpush1.bf16.msra.mxu0 0
        %1853 = vmatprep.subr.bf16.mxu0 0
        %1854 = vmatpush1.bf16.msra.mxu0 0
        %1855 = vmatprep.subr.bf16.mxu0 0
        %1856 = vmatpush1.bf16.msra.mxu0 0
        %1857 = vmatprep.subr.bf16.mxu0 0
        %1858 = vmatpush1.bf16.msra.mxu0 0
        %1859 = vmatprep.subr.bf16.mxu0 0
        %1860 = vmatpush1.bf16.msra.mxu0 0
        %1861 = vmatprep.subr.bf16.mxu0 0
        %1862 = vmatpush1.bf16.msra.mxu0 0
        %1863 = vmatprep.subr.bf16.mxu0 0
        %1864 = vmatpush1.bf16.msra.mxu0 0
        %1865 = vmatprep.mubr.bf16.mxu0 0
        %1866 = vmatmul.mubr.bf16.gmra.mrb[0].mxu0 %v1828
        %v1867 = vpop.f32.mrb[0].mxu0
        %v1868 = vadd.f32 %v1813, %v1867
        %v1869 = vpop.f32.mrb[0].mxu0
        %v1870 = vpop.f32.mrb[0].mxu0
        %v1871 = vadd.f32 %v1813, %v1870
        %v1872 = vpop.f32.mrb[0].mxu0
        %1873 = vmatprep.mubr.bf16.mxu0 0
        %1874 = vmatmul.mubr.bf16.gmra.mrb[0].mxu0 %v1831
        %v1875 = vpop.f32.mrb[0].mxu0
        %v1876 = vadd.f32 %v1813, %v1875
        %v1877 = vpop.f32.mrb[0].mxu0
        %v1878 = vpop.f32.mrb[0].mxu0
        %v1879 = vadd.f32 %v1813, %v1878
        %v1880 = vpop.f32.mrb[0].mxu0
        %1881 = vdwg.mxu0
        %v1882 = vmul.f32 %v1868, 0.5
        %v1883 = vmul.f32 %v1871, 0.5
        %v1884 = vmul.f32 %v1876, 0.5
        %v1885 = vmul.f32 %v1879, 0.5
        %v1886 = vmul.f32 %v1868, 0.044715
        %v1887 = vmul.f32 %v1871, 0.044715
        %v1888 = vmul.f32 %v1876, 0.044715
        %v1889 = vmul.f32 %v1879, 0.044715
        %v1890 = vmul.f32 %v1886, %v1868
        %v1891 = vmul.f32 %v1887, %v1871
        %v1892 = vmul.f32 %v1888, %v1876
        %v1893 = vmul.f32 %v1889, %v1879
        %v1894 = vmul.f32 %v1890, %v1868
        %v1895 = vmul.f32 %v1891, %v1871
        %v1896 = vmul.f32 %v1892, %v1876
        %v1897 = vmul.f32 %v1893, %v1879
        %v1898 = vadd.f32 %v1868, %v1894
        %v1899 = vadd.f32 %v1871, %v1895
        %v1900 = vadd.f32 %v1876, %v1896
        %v1901 = vadd.f32 %v1879, %v1897
        %v1902 = vmul.f32 %v1898, 0.7978846
        %v1903 = vmul.f32 %v1899, 0.7978846
        %v1904 = vmul.f32 %v1900, 0.7978846
        %v1905 = vmul.f32 %v1901, 0.7978846
        %v1906 = vtanh.pop %v1902
        %v1907 = vtanh.pop %v1903
        %v1908 = vtanh.pop %v1904
        %v1909 = vtanh.pop %v1905
        %v1910 = vadd.f32 %v1906, 1.0
        %v1911 = vadd.f32 %v1907, 1.0
        %v1912 = vadd.f32 %v1908, 1.0
        %v1913 = vadd.f32 %v1909, 1.0
        %v1914 = vmul.f32 %v1882, %v1910
        %v1915 = vmul.f32 %v1883, %v1911
        %v1916 = vmul.f32 %v1884, %v1912
        %v1917 = vmul.f32 %v1885, %v1913
        %v1918 = vpack.c.bf16 %v1915, %v1914
        %v1919 = vpack.c.bf16 %v1917, %v1916
        %v1920 = vld [vmem:[%s691] sm:$0xf]
        %v1921 = vld [vmem:[%s691 + $0x4] sm:$0xf]
        %v1922 = vld [vmem:[%s691 + $0x8] sm:$0xf]
        %v1923 = vld [vmem:[%s691 + $0xc] sm:$0xf]
        %v1924 = vld [vmem:[%s691 + $0x10] sm:$0xf]
        %v1925 = vld [vmem:[%s691 + $0x14] sm:$0xf]
        %v1926 = vld [vmem:[%s691 + $0x18] sm:$0xf]
        %v1927 = vld [vmem:[%s691 + $0x1c] sm:$0xf]
        %v1928 = vld [vmem:[%s691 + $0x20] sm:$0xf]
        %v1929 = vld [vmem:[%s691 + $0x24] sm:$0xf]
        %v1930 = vld [vmem:[%s691 + $0x28] sm:$0xf]
        %v1931 = vld [vmem:[%s691 + $0x2c] sm:$0xf]
        %v1932 = vld [vmem:[%s691 + $0x30] sm:$0xf]
        %v1933 = vld [vmem:[%s691 + $0x34] sm:$0xf]
        %v1934 = vld [vmem:[%s691 + $0x38] sm:$0xf]
        %v1935 = vld [vmem:[%s691 + $0x3c] sm:$0xf]
        %v1952 = vunpack.c.l.b16 %v1920
        %v1953 = vunpack.c.l.b16 %v1921
        %v1954 = vunpack.c.l.b16 %v1922
        %v1955 = vunpack.c.l.b16 %v1923
        %v1956 = vunpack.c.l.b16 %v1924
        %v1957 = vunpack.c.l.b16 %v1925
        %v1958 = vunpack.c.l.b16 %v1926
        %v1959 = vunpack.c.l.b16 %v1927
        %v1960 = vunpack.c.l.b16 %v1928
        %v1961 = vunpack.c.l.b16 %v1929
        %v1962 = vunpack.c.l.b16 %v1930
        %v1963 = vunpack.c.l.b16 %v1931
        %v1964 = vunpack.c.l.b16 %v1932
        %v1965 = vunpack.c.l.b16 %v1933
        %v1966 = vunpack.c.l.b16 %v1934
        %v1967 = vunpack.c.l.b16 %v1935
        %v1968 = vpack.c.b16 %v1953, %v1952
        %v1969 = vpack.c.b16 %v1955, %v1954
        %v1970 = vpack.c.b16 %v1957, %v1956
        %v1971 = vpack.c.b16 %v1959, %v1958
        %v1972 = vpack.c.b16 %v1961, %v1960
        %v1973 = vpack.c.b16 %v1963, %v1962
        %v1974 = vpack.c.b16 %v1965, %v1964
        %v1975 = vpack.c.b16 %v1967, %v1966
        %1984 = vmatprep.subr.bf16.mxu0 0
        %1985 = vmatpush1.bf16.msra.mxu0 %v1968
        %1986 = vmatprep.subr.bf16.mxu0 0
        %1987 = vmatpush1.bf16.msra.mxu0 %v1969
        %1988 = vmatprep.subr.bf16.mxu0 0
        %1989 = vmatpush1.bf16.msra.mxu0 %v1970
        %1990 = vmatprep.subr.bf16.mxu0 0
        %1991 = vmatpush1.bf16.msra.mxu0 %v1971
        %1992 = vmatprep.subr.bf16.mxu0 0
        %1993 = vmatpush1.bf16.msra.mxu0 %v1972
        %1994 = vmatprep.subr.bf16.mxu0 0
        %1995 = vmatpush1.bf16.msra.mxu0 %v1973
        %1996 = vmatprep.subr.bf16.mxu0 0
        %1997 = vmatpush1.bf16.msra.mxu0 %v1974
        %1998 = vmatprep.subr.bf16.mxu0 0
        %1999 = vmatpush1.bf16.msra.mxu0 %v1975
        %2000 = vmatprep.subr.bf16.mxu0 0
        %2001 = vmatpush1.bf16.msra.mxu0 0
        %2002 = vmatprep.subr.bf16.mxu0 0
        %2003 = vmatpush1.bf16.msra.mxu0 0
        %2004 = vmatprep.subr.bf16.mxu0 0
        %2005 = vmatpush1.bf16.msra.mxu0 0
        %2006 = vmatprep.subr.bf16.mxu0 0
        %2007 = vmatpush1.bf16.msra.mxu0 0
        %2008 = vmatprep.subr.bf16.mxu0 0
        %2009 = vmatpush1.bf16.msra.mxu0 0
        %2010 = vmatprep.subr.bf16.mxu0 0
        %2011 = vmatpush1.bf16.msra.mxu0 0
        %2012 = vmatprep.subr.bf16.mxu0 0
        %2013 = vmatpush1.bf16.msra.mxu0 0
        %2014 = vmatprep.subr.bf16.mxu0 0
        %2015 = vmatpush1.bf16.msra.mxu0 0
        %2016 = vmatprep.mubr.bf16.mxu0 0
        %2017 = vmatmul.mubr.bf16.gmra.mrb[0].mxu0 %v1918
        %v2018 = vpop.f32.mrb[0].mxu0
        %v2019 = vadd.f32 0.0, %v2018
        %v2020 = vpop.f32.mrb[0].mxu0
        %v2021 = vpop.f32.mrb[0].mxu0
        %v2022 = vadd.f32 0.0, %v2021
        %v2023 = vpop.f32.mrb[0].mxu0
        %2024 = vmatprep.mubr.bf16.mxu0 0
        %2025 = vmatmul.mubr.bf16.gmra.mrb[0].mxu0 %v1919
        %v2026 = vpop.f32.mrb[0].mxu0
        %v2027 = vadd.f32 0.0, %v2026
        %v2028 = vpop.f32.mrb[0].mxu0
        %v2029 = vpop.f32.mrb[0].mxu0
        %v2030 = vadd.f32 0.0, %v2029
        %v2031 = vpop.f32.mrb[0].mxu0
        %2032 = vdwg.mxu0
        %v2033 = vadd.f32 %v1724, %v2019
        %v2034 = vadd.f32 %v1725, %v2022
        %v2035 = vadd.f32 %v1726, %v2027
        %v2036 = vadd.f32 %v1727, %v2030
        %v2037 = vld [vmem:[%s694] sm:$0x1]
        %v2039 = vlaneseq
        %v2040 = vshrl.u32 %v2039, 7
        %v2041 = vsub.s32 0, %v2040
        %v2042 = vrot.slane %v2037, %v2041
        %v2044 = vadd.f32 %v2033, %v2042
        %v2045 = vadd.f32 %v2034, %v2042
        %v2046 = vadd.f32 %v2035, %v2042
        %v2047 = vadd.f32 %v2036, %v2042
        %2048 = vst.msk [vmem:[#allocation2] sm:$0xff] %vm919, %v2044
        %2049 = vst.msk [vmem:[#allocation2 + $0x8] sm:$0xff] %vm919, %v2045
        %2050 = vst.msk [vmem:[#allocation2 + $0x10] sm:$0xff] %vm919, %v2046
        %2051 = vst.msk [vmem:[#allocation2 + $0x18] sm:$0xff] %vm919, %v2047
        %p2052 = scmp.eq.s32.totalorder %s32, 1
        // Predicated region
        $region92: #{tpu_custom_call.1} parent=79 // pred_check
          %p2053 = pneg %p2052
        $region93: #{tpu_custom_call.1} parent=79 // pred_check_branch
          %2055 = sbr.rel (%p2053) target = $region95
        $region94: #{tpu_custom_call.1} parent=79 // pred_region
          %v2056 = vld [vmem:[#allocation2] sm:$0xff]
          %v2057 = vld [vmem:[#allocation2 + $0x8] sm:$0xff]
          %v2058 = vld [vmem:[#allocation2 + $0x10] sm:$0xff]
          %v2059 = vld [vmem:[#allocation2 + $0x18] sm:$0xff]
          %v2060 = vmul.f32 %v2056, %v2056
          %v2061 = vmul.f32 %v2057, %v2057
          %v2062 = vmul.f32 %v2058, %v2058
          %v2063 = vmul.f32 %v2059, %v2059
          %v2064 = vsel %vm919, %v2060, 0.0
          %2065 = vadd.xlane.f32.xlu0 %v2064
          %v2066 = vpop.xlane.xlu0 %2065
          %v2067 = vsel %vm919, %v2061, 0.0
          %2068 = vadd.xlane.f32.xlu0 %v2067
          %v2069 = vpop.xlane.xlu0 %2068
          %v2070 = vsel %vm919, %v2062, 0.0
          %2071 = vadd.xlane.f32.xlu0 %v2070
          %v2072 = vpop.xlane.xlu0 %2071
          %v2073 = vsel %vm919, %v2063, 0.0
          %2074 = vadd.xlane.f32.xlu0 %v2073
          %v2075 = vpop.xlane.xlu0 %2074
          %v2076 = vmax.f32 %v2066, 1e-24
          %v2077 = vmax.f32 %v2069, 1e-24
          %v2078 = vmax.f32 %v2072, 1e-24
          %v2079 = vmax.f32 %v2075, 1e-24
          %v2080 = vrsqrt.pop %v2076
          %v2081 = vrsqrt.pop %v2077
          %v2082 = vrsqrt.pop %v2078
          %v2083 = vrsqrt.pop %v2079
          %v2084 = vmul.f32 %v2056, %v2080
          %v2085 = vmul.f32 %v2057, %v2081
          %v2086 = vmul.f32 %v2058, %v2082
          %v2087 = vmul.f32 %v2059, %v2083
          %2088 = vst.msk [vmem:[#allocation5] sm:$0xff] %vm919, %v2084
          %2089 = vst.msk [vmem:[#allocation5 + $0x8] sm:$0xff] %vm919, %v2085
          %2090 = vst.msk [vmem:[#allocation5 + $0x10] sm:$0xff] %vm919, %v2086
          %2091 = vst.msk [vmem:[#allocation5 + $0x18] sm:$0xff] %vm919, %v2087
        $region95: #{tpu_custom_call.1} parent=79 // pred_fallthru
          _
        // Predicated region
        $region96: #{tpu_custom_call.1} parent=79 // pred_check
          %p2092 = pneg %p437
        $region97: #{tpu_custom_call.1} parent=79 // pred_check_branch
          %2094 = sbr.rel (%p2092) target = $region99
        $region98: #{tpu_custom_call.1} parent=79 // pred_region
          %s2095 = smul.u32 2, %s31
          %s2097 = ssub.s32 512, 512
          %2098 = vsyncadd [#allocation6], %s2097
          %s2099 = smul.addr %s2095, 2
          %s2100 = smul.addr %s2099, 128
          %s2101 = scalar_lea.hbm %s15, %s2100
          %s2102 = sshll.u32 [#allocation5], 4
          %s2103 = int_to_ptr.vmem [resolvable:$true] %s2102
          %2108 = dma.vmem_to_hbm [thread:$0]  %s2103, 512, %s2101, [#allocation6], 128, 128, 8
        $region99: #{tpu_custom_call.1} parent=79 // pred_fallthru
          _
        // Predicated region
        $region100: #{tpu_custom_call.1} parent=79 // pred_check
          %p2109 = pneg %p437
        $region101: #{tpu_custom_call.1} parent=79 // pred_check_branch
          %2111 = sbr.rel (%p2109) target = $region103
        $region102: #{tpu_custom_call.1} parent=79 // pred_region
          %2112 = dma.done [#allocation6], 512
        $region103: #{tpu_custom_call.1} parent=79 // pred_fallthru
          _
      $region80: #{tpu_custom_call.1} parent=5 // pred_fallthru
        _
      %p2113 = scmp.le.s32.totalorder 2, %s22
      // Predicated region
      $region104: #{tpu_custom_call.1} parent=5 // pred_check
        %p2114 = pneg %p2113
      $region105: #{tpu_custom_call.1} parent=5 // pred_check_branch
        %2116 = sbr.rel (%p2114) target = $region107
      $region106: #{tpu_custom_call.1} parent=5 // pred_region
        %s2117 = ssub.s32 %s22, 2
      $region107: #{tpu_custom_call.1} parent=5 // pred_fallthru
        _
    $region6: #{tpu_custom_call.1} parent=1 // loop_footer
      %s26 = sadd.s32 1, %s22
    $region7: #{tpu_custom_call.1} parent=1 // loop_footer_branch
      %21 = sbr.rel target = $region3
    $region8: #{tpu_custom_call.1} parent=1 // loop_exit
      _
    %2118 = vsyncpa [#allocation6], 1
    %s2119 = scalar_lea.sflag [#allocation6], 1
    %2120 = vsyncpa %s2119, 1

</llo_original>
